<compile_context>
chip_gen: v7x
topology: tpu7x:2x2x1
jax: 0.10.0
libtpu: 0.0.40
codegen_flags: <defaults>
</compile_context>

<pallas_src>
import functools

import jax
import jax.numpy as jnp
from jax.experimental import pallas as pl
from jax.experimental.pallas import tpu as pltpu


# -------- PyTorch size formula (verbatim from AbstractCNN.output_size_1d_pt) --
def output_size_1d_pt(seq_len, padding, dilation, kernel_size, stride):
    return (seq_len + 2 * padding - dilation * (kernel_size - 1) - 1) // stride + 1


def _round_up(x, m):
    return ((x + m - 1) // m) * m


# ------------------------------ fused forward --------------------------------
@functools.partial(jax.jit, static_argnums=(2, 3))
def cnn_forward(x, params, conv_kernel_size, pool_kernel_size):
    """x: (B, C_in, L) float32 (PyTorch NCL).  Returns (B, n_targets)."""
    conv_w, conv_b, fc_w, fc_b = params
    C_out, C_in, K = conv_w.shape
    B, _, L = x.shape
    P = pool_kernel_size
    N = fc_b.shape[0]
    assert K == conv_kernel_size

    # Length math via the module's own formula.
    L_out = output_size_1d_pt(L, 0, 1, K, 1)
    L_pool = output_size_1d_pt(L_out, 0, 1, P, P)
    CONV_ROWS = L_pool * P              # conv rows actually consumed (<= L_out)
    WROWS = (L_pool - 1) * P + 1        # rows needed of the sliding-window max

    # Lane/sublane-friendly padded sizes (zero padding keeps math exact).
    C_in_pad = _round_up(max(C_in, 8), 8)
    C_out_pad = _round_up(C_out, 128)
    N_pad = _round_up(N, 128)
    L_pad = _round_up(max(L, CONV_ROWS + K - 1), 8)

    # ---- host-side layout prep (done once per call, tiny) ----
    # x: NCL -> (B, L_pad, C_in_pad)
    x_nlc = jnp.transpose(x, (0, 2, 1))
    x_nlc = jnp.pad(x_nlc, ((0, 0), (0, L_pad - L), (0, C_in_pad - C_in)))
    # conv weight: (C_out, C_in, K) -> (K, C_in_pad, C_out_pad)
    cw = jnp.transpose(conv_w, (2, 1, 0))
    cw = jnp.pad(cw, ((0, 0), (0, C_in_pad - C_in), (0, C_out_pad - C_out)))
    cb = jnp.pad(conv_b.reshape(1, C_out), ((0, 0), (0, C_out_pad - C_out)))
    # fc weight: rows indexed c*L_pool + l (PyTorch (C, L) flatten)
    #   -> (L_pool, C_out_pad, N_pad)
    fw = fc_w.reshape(C_out, L_pool, N).transpose(1, 0, 2)
    fw = jnp.pad(fw, ((0, 0), (0, C_out_pad - C_out), (0, N_pad - N)))
    fb = jnp.pad(fc_b.reshape(1, N), ((0, 0), (0, N_pad - N)))

    def kernel(x_ref, cw_ref, cb_ref, fw_ref, fb_ref, o_ref):
        # ---- Conv1d as K shifted matmuls, f32 accumulation (MXU) ----
        acc = jnp.dot(x_ref[0:CONV_ROWS, :], cw_ref[0],
                      preferred_element_type=jnp.float32)
        for k in range(1, K):
            acc = acc + jnp.dot(x_ref[k:k + CONV_ROWS, :], cw_ref[k],
                                preferred_element_type=jnp.float32)
        # bias (loaded once) + ReLU (VPU)
        conv = jnp.maximum(acc + cb_ref[...], 0.0)        # (CONV_ROWS, C_out_pad)

        # ---- MaxPool1d: elementwise max of P shifted contiguous slices ----
        wmax = conv[0:WROWS, :]
        for p in range(1, P):
            wmax = jnp.maximum(wmax, conv[p:p + WROWS, :])
        # pooled window l lives at row l*P of wmax — consumed directly below.

        # ---- Linear head: sum_l pooled_row(l) @ W_l (MXU), bias loaded once --
        out = fb_ref[...].astype(jnp.float32)             # (1, N_pad)
        for l in range(L_pool):
            out = out + jnp.dot(wmax[l * P:l * P + 1, :], fw_ref[l],
                                preferred_element_type=jnp.float32)
        o_ref[...] = out.astype(o_ref.dtype)

    out_pad = pl.pallas_call(
        kernel,
        out_shape=jax.ShapeDtypeStruct((B, 1, N_pad), jnp.float32),
        grid=(B,),
        in_specs=[
            pl.BlockSpec((None, L_pad, C_in_pad), lambda b: (b, 0, 0)),      # x
            pl.BlockSpec((K, C_in_pad, C_out_pad), lambda b: (0, 0, 0)),     # conv W
            pl.BlockSpec((1, C_out_pad), lambda b: (0, 0)),                  # conv b
            pl.BlockSpec((L_pool, C_out_pad, N_pad), lambda b: (0, 0, 0)),   # fc W
            pl.BlockSpec((1, N_pad), lambda b: (0, 0)),                      # fc b
        ],
        out_specs=pl.BlockSpec((None, 1, N_pad), lambda b: (b, 0, 0)),
        compiler_params=pltpu.CompilerParams(dimension_semantics=("parallel",)),
    )(x_nlc, cw, cb, fw, fb)

    return out_pad[:, 0, :N]


# ------------------------- pure-JAX reference (check) -------------------------
def reference_forward(x, params, K, P):
    conv_w, conv_b, fc_w, fc_b = params
    B, C_in, L = x.shape
    C_out = conv_w.shape[0]
    L_out = output_size_1d_pt(L, 0, 1, K, 1)
    L_pool = output_size_1d_pt(L_out, 0, 1, P, P)
    cols = jnp.stack([x[:, :, k:k + L_out] for k in range(K)], axis=-1)  # (B,C,L_out,K)
    conv = jnp.einsum('bclk,ock->bol', cols, conv_w) + conv_b[None, :, None]
    conv = jnp.maximum(conv, 0.0)
    pooled = conv[:, :, :L_pool * P].reshape(B, C_out, L_pool, P).max(-1)
    flat = pooled.reshape(B, C_out * L_pool)
    return flat @ fc_w + fc_b


# ------------------------------------ main ------------------------------------
if __name__ == "__main__":
    B = 2
    C_in = 4                 # one-hot DNA channels (typical for this base class)
    sequence_length = 64
    n_targets = 8
    conv_kernel_size = 8
    pool_kernel_size = 4
    hidden = 16              # conv output channels

    L_out = output_size_1d_pt(sequence_length, 0, 1, conv_kernel_size, 1)        # 57
    L_pool = output_size_1d_pt(L_out, 0, 1, pool_kernel_size, pool_kernel_size)  # 14
    features = hidden * L_pool

    x = jax.random.normal(jax.random.PRNGKey(0), (B, C_in, sequence_length), jnp.float32)

    pk = jax.random.PRNGKey(1)
    k1, k2, k3, k4 = jax.random.split(pk, 4)
    conv_w = 0.1 * jax.random.normal(k1, (hidden, C_in, conv_kernel_size), jnp.float32)
    conv_b = 0.1 * jax.random.normal(k2, (hidden,), jnp.float32)
    fc_w = 0.1 * jax.random.normal(k3, (features, n_targets), jnp.float32)
    fc_b = 0.1 * jax.random.normal(k4, (n_targets,), jnp.float32)
    params = (conv_w, conv_b, fc_w, fc_b)

    out = cnn_forward(x, params, conv_kernel_size, pool_kernel_size)
    out = jax.block_until_ready(out)
    assert out.shape == (B, n_targets), out.shape
    assert jnp.all(jnp.isfinite(out))

    ref = reference_forward(x, params, conv_kernel_size, pool_kernel_size)
    assert jnp.allclose(out, ref, atol=2e-2, rtol=2e-2), float(jnp.max(jnp.abs(out - ref)))

    print("KERNEL_OK")
</pallas_src>

<mosaic_0001>
module attributes {stable_mosaic.version = 11 : i64} {
  func.func @kernel(%arg0: i32, %arg1: memref<1x64x8xf32, #tpu.memory_space<vmem>>, %arg2: memref<8x8x128xf32, #tpu.memory_space<vmem>>, %arg3: memref<1x128xf32, #tpu.memory_space<vmem>>, %arg4: memref<14x128x128xf32, #tpu.memory_space<vmem>>, %arg5: memref<1x128xf32, #tpu.memory_space<vmem>>, %arg6: memref<1x1x128xf32, #tpu.memory_space<vmem>>) attributes {dimension_semantics = [#tpu.dimension_semantics<parallel>], iteration_bounds = array<i64: 2>, scalar_prefetch = 0 : i64, scratch_operands = 0 : i64, tpu.core_type = #tpu.core_type<tc>, window_params = [{transform_indices = @transform_0, window_bounds = array<i64: 1, 64, 8>}, {pipeline_mode = #tpu.pipeline_mode<synchronous>, transform_indices = @transform_1, window_bounds = array<i64: 8, 8, 128>}, {pipeline_mode = #tpu.pipeline_mode<synchronous>, transform_indices = @transform_2, window_bounds = array<i64: 1, 128>}, {pipeline_mode = #tpu.pipeline_mode<synchronous>, transform_indices = @transform_3, window_bounds = array<i64: 14, 128, 128>}, {pipeline_mode = #tpu.pipeline_mode<synchronous>, transform_indices = @transform_4, window_bounds = array<i64: 1, 128>}, {transform_indices = @transform_5, window_bounds = array<i64: 1, 1, 128>}]} {
    %c0 = arith.constant 0 : index
    %c0_0 = arith.constant 0 : index
    %c0_1 = arith.constant 0 : index
    %0 = vector.load %arg1[%c0, %c0_0, %c0_1] : memref<1x64x8xf32, #tpu.memory_space<vmem>>, vector<1x56x8xf32>
    %1 = vector.shape_cast %0 : vector<1x56x8xf32> to vector<56x8xf32>
    %c0_2 = arith.constant 0 : index
    %c0_3 = arith.constant 0 : index
    %c0_4 = arith.constant 0 : index
    %2 = vector.load %arg2[%c0_2, %c0_3, %c0_4] : memref<8x8x128xf32, #tpu.memory_space<vmem>>, vector<1x8x128xf32>
    %3 = vector.shape_cast %2 : vector<1x8x128xf32> to vector<8x128xf32>
    %cst = arith.constant dense<0.000000e+00> : vector<56x128xf32>
    %4 = tpu.matmul %1, %3, %cst {dimension_numbers = #tpu.dot_dimension_numbers<[1], [0], [0], [1], [0, 0, 1, 1], [], []>} : vector<56x8xf32>, vector<8x128xf32>, vector<56x128xf32> -> vector<56x128xf32>
    %c0_5 = arith.constant 0 : index
    %c1 = arith.constant 1 : index
    %c0_6 = arith.constant 0 : index
    %5 = vector.load %arg1[%c0_5, %c1, %c0_6] : memref<1x64x8xf32, #tpu.memory_space<vmem>>, vector<1x56x8xf32>
    %6 = vector.shape_cast %5 : vector<1x56x8xf32> to vector<56x8xf32>
    %c1_7 = arith.constant 1 : index
    %c0_8 = arith.constant 0 : index
    %c0_9 = arith.constant 0 : index
    %7 = vector.load %arg2[%c1_7, %c0_8, %c0_9] : memref<8x8x128xf32, #tpu.memory_space<vmem>>, vector<1x8x128xf32>
    %8 = vector.shape_cast %7 : vector<1x8x128xf32> to vector<8x128xf32>
    %cst_10 = arith.constant dense<0.000000e+00> : vector<56x128xf32>
    %9 = tpu.matmul %6, %8, %cst_10 {dimension_numbers = #tpu.dot_dimension_numbers<[1], [0], [0], [1], [0, 0, 1, 1], [], []>} : vector<56x8xf32>, vector<8x128xf32>, vector<56x128xf32> -> vector<56x128xf32>
    %10 = arith.addf %4, %9 : vector<56x128xf32>
    %c0_11 = arith.constant 0 : index
    %c2 = arith.constant 2 : index
    %c0_12 = arith.constant 0 : index
    %11 = vector.load %arg1[%c0_11, %c2, %c0_12] : memref<1x64x8xf32, #tpu.memory_space<vmem>>, vector<1x56x8xf32>
    %12 = vector.shape_cast %11 : vector<1x56x8xf32> to vector<56x8xf32>
    %c2_13 = arith.constant 2 : index
    %c0_14 = arith.constant 0 : index
    %c0_15 = arith.constant 0 : index
    %13 = vector.load %arg2[%c2_13, %c0_14, %c0_15] : memref<8x8x128xf32, #tpu.memory_space<vmem>>, vector<1x8x128xf32>
    %14 = vector.shape_cast %13 : vector<1x8x128xf32> to vector<8x128xf32>
    %cst_16 = arith.constant dense<0.000000e+00> : vector<56x128xf32>
    %15 = tpu.matmul %12, %14, %cst_16 {dimension_numbers = #tpu.dot_dimension_numbers<[1], [0], [0], [1], [0, 0, 1, 1], [], []>} : vector<56x8xf32>, vector<8x128xf32>, vector<56x128xf32> -> vector<56x128xf32>
    %16 = arith.addf %10, %15 : vector<56x128xf32>
    %c0_17 = arith.constant 0 : index
    %c3 = arith.constant 3 : index
    %c0_18 = arith.constant 0 : index
    %17 = vector.load %arg1[%c0_17, %c3, %c0_18] : memref<1x64x8xf32, #tpu.memory_space<vmem>>, vector<1x56x8xf32>
    %18 = vector.shape_cast %17 : vector<1x56x8xf32> to vector<56x8xf32>
    %c3_19 = arith.constant 3 : index
    %c0_20 = arith.constant 0 : index
    %c0_21 = arith.constant 0 : index
    %19 = vector.load %arg2[%c3_19, %c0_20, %c0_21] : memref<8x8x128xf32, #tpu.memory_space<vmem>>, vector<1x8x128xf32>
    %20 = vector.shape_cast %19 : vector<1x8x128xf32> to vector<8x128xf32>
    %cst_22 = arith.constant dense<0.000000e+00> : vector<56x128xf32>
    %21 = tpu.matmul %18, %20, %cst_22 {dimension_numbers = #tpu.dot_dimension_numbers<[1], [0], [0], [1], [0, 0, 1, 1], [], []>} : vector<56x8xf32>, vector<8x128xf32>, vector<56x128xf32> -> vector<56x128xf32>
    %22 = arith.addf %16, %21 : vector<56x128xf32>
    %c0_23 = arith.constant 0 : index
    %c4 = arith.constant 4 : index
    %c0_24 = arith.constant 0 : index
    %23 = vector.load %arg1[%c0_23, %c4, %c0_24] : memref<1x64x8xf32, #tpu.memory_space<vmem>>, vector<1x56x8xf32>
    %24 = vector.shape_cast %23 : vector<1x56x8xf32> to vector<56x8xf32>
    %c4_25 = arith.constant 4 : index
    %c0_26 = arith.constant 0 : index
    %c0_27 = arith.constant 0 : index
    %25 = vector.load %arg2[%c4_25, %c0_26, %c0_27] : memref<8x8x128xf32, #tpu.memory_space<vmem>>, vector<1x8x128xf32>
    %26 = vector.shape_cast %25 : vector<1x8x128xf32> to vector<8x128xf32>
    %cst_28 = arith.constant dense<0.000000e+00> : vector<56x128xf32>
    %27 = tpu.matmul %24, %26, %cst_28 {dimension_numbers = #tpu.dot_dimension_numbers<[1], [0], [0], [1], [0, 0, 1, 1], [], []>} : vector<56x8xf32>, vector<8x128xf32>, vector<56x128xf32> -> vector<56x128xf32>
    %28 = arith.addf %22, %27 : vector<56x128xf32>
    %c0_29 = arith.constant 0 : index
    %c5 = arith.constant 5 : index
    %c0_30 = arith.constant 0 : index
    %29 = vector.load %arg1[%c0_29, %c5, %c0_30] : memref<1x64x8xf32, #tpu.memory_space<vmem>>, vector<1x56x8xf32>
    %30 = vector.shape_cast %29 : vector<1x56x8xf32> to vector<56x8xf32>
    %c5_31 = arith.constant 5 : index
    %c0_32 = arith.constant 0 : index
    %c0_33 = arith.constant 0 : index
    %31 = vector.load %arg2[%c5_31, %c0_32, %c0_33] : memref<8x8x128xf32, #tpu.memory_space<vmem>>, vector<1x8x128xf32>
    %32 = vector.shape_cast %31 : vector<1x8x128xf32> to vector<8x128xf32>
    %cst_34 = arith.constant dense<0.000000e+00> : vector<56x128xf32>
    %33 = tpu.matmul %30, %32, %cst_34 {dimension_numbers = #tpu.dot_dimension_numbers<[1], [0], [0], [1], [0, 0, 1, 1], [], []>} : vector<56x8xf32>, vector<8x128xf32>, vector<56x128xf32> -> vector<56x128xf32>
    %34 = arith.addf %28, %33 : vector<56x128xf32>
    %c0_35 = arith.constant 0 : index
    %c6 = arith.constant 6 : index
    %c0_36 = arith.constant 0 : index
    %35 = vector.load %arg1[%c0_35, %c6, %c0_36] : memref<1x64x8xf32, #tpu.memory_space<vmem>>, vector<1x56x8xf32>
    %36 = vector.shape_cast %35 : vector<1x56x8xf32> to vector<56x8xf32>
    %c6_37 = arith.constant 6 : index
    %c0_38 = arith.constant 0 : index
    %c0_39 = arith.constant 0 : index
    %37 = vector.load %arg2[%c6_37, %c0_38, %c0_39] : memref<8x8x128xf32, #tpu.memory_space<vmem>>, vector<1x8x128xf32>
    %38 = vector.shape_cast %37 : vector<1x8x128xf32> to vector<8x128xf32>
    %cst_40 = arith.constant dense<0.000000e+00> : vector<56x128xf32>
    %39 = tpu.matmul %36, %38, %cst_40 {dimension_numbers = #tpu.dot_dimension_numbers<[1], [0], [0], [1], [0, 0, 1, 1], [], []>} : vector<56x8xf32>, vector<8x128xf32>, vector<56x128xf32> -> vector<56x128xf32>
    %40 = arith.addf %34, %39 : vector<56x128xf32>
    %c0_41 = arith.constant 0 : index
    %c7 = arith.constant 7 : index
    %c0_42 = arith.constant 0 : index
    %41 = vector.load %arg1[%c0_41, %c7, %c0_42] : memref<1x64x8xf32, #tpu.memory_space<vmem>>, vector<1x56x8xf32>
    %42 = vector.shape_cast %41 : vector<1x56x8xf32> to vector<56x8xf32>
    %c7_43 = arith.constant 7 : index
    %c0_44 = arith.constant 0 : index
    %c0_45 = arith.constant 0 : index
    %43 = vector.load %arg2[%c7_43, %c0_44, %c0_45] : memref<8x8x128xf32, #tpu.memory_space<vmem>>, vector<1x8x128xf32>
    %44 = vector.shape_cast %43 : vector<1x8x128xf32> to vector<8x128xf32>
    %cst_46 = arith.constant dense<0.000000e+00> : vector<56x128xf32>
    %45 = tpu.matmul %42, %44, %cst_46 {dimension_numbers = #tpu.dot_dimension_numbers<[1], [0], [0], [1], [0, 0, 1, 1], [], []>} : vector<56x8xf32>, vector<8x128xf32>, vector<56x128xf32> -> vector<56x128xf32>
    %46 = arith.addf %40, %45 : vector<56x128xf32>
    %c0_47 = arith.constant 0 : index
    %c0_48 = arith.constant 0 : index
    %47 = vector.load %arg3[%c0_47, %c0_48] : memref<1x128xf32, #tpu.memory_space<vmem>>, vector<1x128xf32>
    %48 = vector.broadcast %47 : vector<1x128xf32> to vector<56x128xf32>
    %49 = arith.addf %46, %48 : vector<56x128xf32>
    %cst_49 = arith.constant 0.000000e+00 : f32
    %50 = vector.broadcast %cst_49 : f32 to vector<56x128xf32>
    %51 = arith.maximumf %49, %50 : vector<56x128xf32>
    %52 = vector.extract_strided_slice %51 {offsets = [0, 0], sizes = [53, 128], strides = [1, 1]} : vector<56x128xf32> to vector<53x128xf32>
    %53 = vector.extract_strided_slice %51 {offsets = [1, 0], sizes = [53, 128], strides = [1, 1]} : vector<56x128xf32> to vector<53x128xf32>
    %54 = arith.maximumf %52, %53 : vector<53x128xf32>
    %55 = vector.extract_strided_slice %51 {offsets = [2, 0], sizes = [53, 128], strides = [1, 1]} : vector<56x128xf32> to vector<53x128xf32>
    %56 = arith.maximumf %54, %55 : vector<53x128xf32>
    %57 = vector.extract_strided_slice %51 {offsets = [3, 0], sizes = [53, 128], strides = [1, 1]} : vector<56x128xf32> to vector<53x128xf32>
    %58 = arith.maximumf %56, %57 : vector<53x128xf32>
    %c0_50 = arith.constant 0 : index
    %c0_51 = arith.constant 0 : index
    %59 = vector.load %arg5[%c0_50, %c0_51] : memref<1x128xf32, #tpu.memory_space<vmem>>, vector<1x128xf32>
    %60 = vector.extract_strided_slice %58 {offsets = [0, 0], sizes = [1, 128], strides = [1, 1]} : vector<53x128xf32> to vector<1x128xf32>
    %c0_52 = arith.constant 0 : index
    %c0_53 = arith.constant 0 : index
    %c0_54 = arith.constant 0 : index
    %61 = vector.load %arg4[%c0_52, %c0_53, %c0_54] : memref<14x128x128xf32, #tpu.memory_space<vmem>>, vector<1x128x128xf32>
    %62 = vector.shape_cast %61 : vector<1x128x128xf32> to vector<128x128xf32>
    %cst_55 = arith.constant dense<0.000000e+00> : vector<1x128xf32>
    %63 = tpu.matmul %60, %62, %cst_55 {dimension_numbers = #tpu.dot_dimension_numbers<[1], [0], [0], [1], [0, 0, 1, 1], [], []>} : vector<1x128xf32>, vector<128x128xf32>, vector<1x128xf32> -> vector<1x128xf32>
    %64 = arith.addf %59, %63 : vector<1x128xf32>
    %65 = vector.extract_strided_slice %58 {offsets = [4, 0], sizes = [1, 128], strides = [1, 1]} : vector<53x128xf32> to vector<1x128xf32>
    %c1_56 = arith.constant 1 : index
    %c0_57 = arith.constant 0 : index
    %c0_58 = arith.constant 0 : index
    %66 = vector.load %arg4[%c1_56, %c0_57, %c0_58] : memref<14x128x128xf32, #tpu.memory_space<vmem>>, vector<1x128x128xf32>
    %67 = vector.shape_cast %66 : vector<1x128x128xf32> to vector<128x128xf32>
    %cst_59 = arith.constant dense<0.000000e+00> : vector<1x128xf32>
    %68 = tpu.matmul %65, %67, %cst_59 {dimension_numbers = #tpu.dot_dimension_numbers<[1], [0], [0], [1], [0, 0, 1, 1], [], []>} : vector<1x128xf32>, vector<128x128xf32>, vector<1x128xf32> -> vector<1x128xf32>
    %69 = arith.addf %64, %68 : vector<1x128xf32>
    %70 = vector.extract_strided_slice %58 {offsets = [8, 0], sizes = [1, 128], strides = [1, 1]} : vector<53x128xf32> to vector<1x128xf32>
    %c2_60 = arith.constant 2 : index
    %c0_61 = arith.constant 0 : index
    %c0_62 = arith.constant 0 : index
    %71 = vector.load %arg4[%c2_60, %c0_61, %c0_62] : memref<14x128x128xf32, #tpu.memory_space<vmem>>, vector<1x128x128xf32>
    %72 = vector.shape_cast %71 : vector<1x128x128xf32> to vector<128x128xf32>
    %cst_63 = arith.constant dense<0.000000e+00> : vector<1x128xf32>
    %73 = tpu.matmul %70, %72, %cst_63 {dimension_numbers = #tpu.dot_dimension_numbers<[1], [0], [0], [1], [0, 0, 1, 1], [], []>} : vector<1x128xf32>, vector<128x128xf32>, vector<1x128xf32> -> vector<1x128xf32>
    %74 = arith.addf %69, %73 : vector<1x128xf32>
    %75 = vector.extract_strided_slice %58 {offsets = [12, 0], sizes = [1, 128], strides = [1, 1]} : vector<53x128xf32> to vector<1x128xf32>
    %c3_64 = arith.constant 3 : index
    %c0_65 = arith.constant 0 : index
    %c0_66 = arith.constant 0 : index
    %76 = vector.load %arg4[%c3_64, %c0_65, %c0_66] : memref<14x128x128xf32, #tpu.memory_space<vmem>>, vector<1x128x128xf32>
    %77 = vector.shape_cast %76 : vector<1x128x128xf32> to vector<128x128xf32>
    %cst_67 = arith.constant dense<0.000000e+00> : vector<1x128xf32>
    %78 = tpu.matmul %75, %77, %cst_67 {dimension_numbers = #tpu.dot_dimension_numbers<[1], [0], [0], [1], [0, 0, 1, 1], [], []>} : vector<1x128xf32>, vector<128x128xf32>, vector<1x128xf32> -> vector<1x128xf32>
    %79 = arith.addf %74, %78 : vector<1x128xf32>
    %80 = vector.extract_strided_slice %58 {offsets = [16, 0], sizes = [1, 128], strides = [1, 1]} : vector<53x128xf32> to vector<1x128xf32>
    %c4_68 = arith.constant 4 : index
    %c0_69 = arith.constant 0 : index
    %c0_70 = arith.constant 0 : index
    %81 = vector.load %arg4[%c4_68, %c0_69, %c0_70] : memref<14x128x128xf32, #tpu.memory_space<vmem>>, vector<1x128x128xf32>
    %82 = vector.shape_cast %81 : vector<1x128x128xf32> to vector<128x128xf32>
    %cst_71 = arith.constant dense<0.000000e+00> : vector<1x128xf32>
    %83 = tpu.matmul %80, %82, %cst_71 {dimension_numbers = #tpu.dot_dimension_numbers<[1], [0], [0], [1], [0, 0, 1, 1], [], []>} : vector<1x128xf32>, vector<128x128xf32>, vector<1x128xf32> -> vector<1x128xf32>
    %84 = arith.addf %79, %83 : vector<1x128xf32>
    %85 = vector.extract_strided_slice %58 {offsets = [20, 0], sizes = [1, 128], strides = [1, 1]} : vector<53x128xf32> to vector<1x128xf32>
    %c5_72 = arith.constant 5 : index
    %c0_73 = arith.constant 0 : index
    %c0_74 = arith.constant 0 : index
    %86 = vector.load %arg4[%c5_72, %c0_73, %c0_74] : memref<14x128x128xf32, #tpu.memory_space<vmem>>, vector<1x128x128xf32>
    %87 = vector.shape_cast %86 : vector<1x128x128xf32> to vector<128x128xf32>
    %cst_75 = arith.constant dense<0.000000e+00> : vector<1x128xf32>
    %88 = tpu.matmul %85, %87, %cst_75 {dimension_numbers = #tpu.dot_dimension_numbers<[1], [0], [0], [1], [0, 0, 1, 1], [], []>} : vector<1x128xf32>, vector<128x128xf32>, vector<1x128xf32> -> vector<1x128xf32>
    %89 = arith.addf %84, %88 : vector<1x128xf32>
    %90 = vector.extract_strided_slice %58 {offsets = [24, 0], sizes = [1, 128], strides = [1, 1]} : vector<53x128xf32> to vector<1x128xf32>
    %c6_76 = arith.constant 6 : index
    %c0_77 = arith.constant 0 : index
    %c0_78 = arith.constant 0 : index
    %91 = vector.load %arg4[%c6_76, %c0_77, %c0_78] : memref<14x128x128xf32, #tpu.memory_space<vmem>>, vector<1x128x128xf32>
    %92 = vector.shape_cast %91 : vector<1x128x128xf32> to vector<128x128xf32>
    %cst_79 = arith.constant dense<0.000000e+00> : vector<1x128xf32>
    %93 = tpu.matmul %90, %92, %cst_79 {dimension_numbers = #tpu.dot_dimension_numbers<[1], [0], [0], [1], [0, 0, 1, 1], [], []>} : vector<1x128xf32>, vector<128x128xf32>, vector<1x128xf32> -> vector<1x128xf32>
    %94 = arith.addf %89, %93 : vector<1x128xf32>
    %95 = vector.extract_strided_slice %58 {offsets = [28, 0], sizes = [1, 128], strides = [1, 1]} : vector<53x128xf32> to vector<1x128xf32>
    %c7_80 = arith.constant 7 : index
    %c0_81 = arith.constant 0 : index
    %c0_82 = arith.constant 0 : index
    %96 = vector.load %arg4[%c7_80, %c0_81, %c0_82] : memref<14x128x128xf32, #tpu.memory_space<vmem>>, vector<1x128x128xf32>
    %97 = vector.shape_cast %96 : vector<1x128x128xf32> to vector<128x128xf32>
    %cst_83 = arith.constant dense<0.000000e+00> : vector<1x128xf32>
    %98 = tpu.matmul %95, %97, %cst_83 {dimension_numbers = #tpu.dot_dimension_numbers<[1], [0], [0], [1], [0, 0, 1, 1], [], []>} : vector<1x128xf32>, vector<128x128xf32>, vector<1x128xf32> -> vector<1x128xf32>
    %99 = arith.addf %94, %98 : vector<1x128xf32>
    %100 = vector.extract_strided_slice %58 {offsets = [32, 0], sizes = [1, 128], strides = [1, 1]} : vector<53x128xf32> to vector<1x128xf32>
    %c8 = arith.constant 8 : index
    %c0_84 = arith.constant 0 : index
    %c0_85 = arith.constant 0 : index
    %101 = vector.load %arg4[%c8, %c0_84, %c0_85] : memref<14x128x128xf32, #tpu.memory_space<vmem>>, vector<1x128x128xf32>
    %102 = vector.shape_cast %101 : vector<1x128x128xf32> to vector<128x128xf32>
    %cst_86 = arith.constant dense<0.000000e+00> : vector<1x128xf32>
    %103 = tpu.matmul %100, %102, %cst_86 {dimension_numbers = #tpu.dot_dimension_numbers<[1], [0], [0], [1], [0, 0, 1, 1], [], []>} : vector<1x128xf32>, vector<128x128xf32>, vector<1x128xf32> -> vector<1x128xf32>
    %104 = arith.addf %99, %103 : vector<1x128xf32>
    %105 = vector.extract_strided_slice %58 {offsets = [36, 0], sizes = [1, 128], strides = [1, 1]} : vector<53x128xf32> to vector<1x128xf32>
    %c9 = arith.constant 9 : index
    %c0_87 = arith.constant 0 : index
    %c0_88 = arith.constant 0 : index
    %106 = vector.load %arg4[%c9, %c0_87, %c0_88] : memref<14x128x128xf32, #tpu.memory_space<vmem>>, vector<1x128x128xf32>
    %107 = vector.shape_cast %106 : vector<1x128x128xf32> to vector<128x128xf32>
    %cst_89 = arith.constant dense<0.000000e+00> : vector<1x128xf32>
    %108 = tpu.matmul %105, %107, %cst_89 {dimension_numbers = #tpu.dot_dimension_numbers<[1], [0], [0], [1], [0, 0, 1, 1], [], []>} : vector<1x128xf32>, vector<128x128xf32>, vector<1x128xf32> -> vector<1x128xf32>
    %109 = arith.addf %104, %108 : vector<1x128xf32>
    %110 = vector.extract_strided_slice %58 {offsets = [40, 0], sizes = [1, 128], strides = [1, 1]} : vector<53x128xf32> to vector<1x128xf32>
    %c10 = arith.constant 10 : index
    %c0_90 = arith.constant 0 : index
    %c0_91 = arith.constant 0 : index
    %111 = vector.load %arg4[%c10, %c0_90, %c0_91] : memref<14x128x128xf32, #tpu.memory_space<vmem>>, vector<1x128x128xf32>
    %112 = vector.shape_cast %111 : vector<1x128x128xf32> to vector<128x128xf32>
    %cst_92 = arith.constant dense<0.000000e+00> : vector<1x128xf32>
    %113 = tpu.matmul %110, %112, %cst_92 {dimension_numbers = #tpu.dot_dimension_numbers<[1], [0], [0], [1], [0, 0, 1, 1], [], []>} : vector<1x128xf32>, vector<128x128xf32>, vector<1x128xf32> -> vector<1x128xf32>
    %114 = arith.addf %109, %113 : vector<1x128xf32>
    %115 = vector.extract_strided_slice %58 {offsets = [44, 0], sizes = [1, 128], strides = [1, 1]} : vector<53x128xf32> to vector<1x128xf32>
    %c11 = arith.constant 11 : index
    %c0_93 = arith.constant 0 : index
    %c0_94 = arith.constant 0 : index
    %116 = vector.load %arg4[%c11, %c0_93, %c0_94] : memref<14x128x128xf32, #tpu.memory_space<vmem>>, vector<1x128x128xf32>
    %117 = vector.shape_cast %116 : vector<1x128x128xf32> to vector<128x128xf32>
    %cst_95 = arith.constant dense<0.000000e+00> : vector<1x128xf32>
    %118 = tpu.matmul %115, %117, %cst_95 {dimension_numbers = #tpu.dot_dimension_numbers<[1], [0], [0], [1], [0, 0, 1, 1], [], []>} : vector<1x128xf32>, vector<128x128xf32>, vector<1x128xf32> -> vector<1x128xf32>
    %119 = arith.addf %114, %118 : vector<1x128xf32>
    %120 = vector.extract_strided_slice %58 {offsets = [48, 0], sizes = [1, 128], strides = [1, 1]} : vector<53x128xf32> to vector<1x128xf32>
    %c12 = arith.constant 12 : index
    %c0_96 = arith.constant 0 : index
    %c0_97 = arith.constant 0 : index
    %121 = vector.load %arg4[%c12, %c0_96, %c0_97] : memref<14x128x128xf32, #tpu.memory_space<vmem>>, vector<1x128x128xf32>
    %122 = vector.shape_cast %121 : vector<1x128x128xf32> to vector<128x128xf32>
    %cst_98 = arith.constant dense<0.000000e+00> : vector<1x128xf32>
    %123 = tpu.matmul %120, %122, %cst_98 {dimension_numbers = #tpu.dot_dimension_numbers<[1], [0], [0], [1], [0, 0, 1, 1], [], []>} : vector<1x128xf32>, vector<128x128xf32>, vector<1x128xf32> -> vector<1x128xf32>
    %124 = arith.addf %119, %123 : vector<1x128xf32>
    %125 = vector.extract_strided_slice %58 {offsets = [52, 0], sizes = [1, 128], strides = [1, 1]} : vector<53x128xf32> to vector<1x128xf32>
    %c13 = arith.constant 13 : index
    %c0_99 = arith.constant 0 : index
    %c0_100 = arith.constant 0 : index
    %126 = vector.load %arg4[%c13, %c0_99, %c0_100] : memref<14x128x128xf32, #tpu.memory_space<vmem>>, vector<1x128x128xf32>
    %127 = vector.shape_cast %126 : vector<1x128x128xf32> to vector<128x128xf32>
    %cst_101 = arith.constant dense<0.000000e+00> : vector<1x128xf32>
    %128 = tpu.matmul %125, %127, %cst_101 {dimension_numbers = #tpu.dot_dimension_numbers<[1], [0], [0], [1], [0, 0, 1, 1], [], []>} : vector<1x128xf32>, vector<128x128xf32>, vector<1x128xf32> -> vector<1x128xf32>
    %129 = arith.addf %124, %128 : vector<1x128xf32>
    %c0_102 = arith.constant 0 : index
    %c0_103 = arith.constant 0 : index
    %c0_104 = arith.constant 0 : index
    %130 = vector.load %arg6[%c0_102, %c0_103, %c0_104] : memref<1x1x128xf32, #tpu.memory_space<vmem>>, vector<1x1x128xf32>
    %131 = vector.shape_cast %130 : vector<1x1x128xf32> to vector<1x128xf32>
    %132 = vector.shape_cast %129 : vector<1x128xf32> to vector<1x1x128xf32>
    tpu.vector_store %arg6[%c0_102, %c0_103, %c0_104], %132 {strides = array<i32>} : memref<1x1x128xf32, #tpu.memory_space<vmem>>, vector<1x1x128xf32>,
    return
  }
  func.func @transform_0(%arg0: i32) -> (i32, i32, i32) {
    %c0_i32 = arith.constant 0 : i32
    %c0_i32_0 = arith.constant 0 : i32
    %c0_i32_1 = arith.constant 0 : i32
    return %arg0, %c0_i32, %c0_i32_0 : i32, i32, i32
  }
  func.func @transform_1(%arg0: i32) -> (i32, i32, i32) {
    %c0_i32 = arith.constant 0 : i32
    %c0_i32_0 = arith.constant 0 : i32
    %c0_i32_1 = arith.constant 0 : i32
    %c0_i32_2 = arith.constant 0 : i32
    return %c0_i32, %c0_i32_0, %c0_i32_1 : i32, i32, i32
  }
  func.func @transform_2(%arg0: i32) -> (i32, i32) {
    %c0_i32 = arith.constant 0 : i32
    %c0_i32_0 = arith.constant 0 : i32
    %c0_i32_1 = arith.constant 0 : i32
    return %c0_i32, %c0_i32_0 : i32, i32
  }
  func.func @transform_3(%arg0: i32) -> (i32, i32, i32) {
    %c0_i32 = arith.constant 0 : i32
    %c0_i32_0 = arith.constant 0 : i32
    %c0_i32_1 = arith.constant 0 : i32
    %c0_i32_2 = arith.constant 0 : i32
    return %c0_i32, %c0_i32_0, %c0_i32_1 : i32, i32, i32
  }
  func.func @transform_4(%arg0: i32) -> (i32, i32) {
    %c0_i32 = arith.constant 0 : i32
    %c0_i32_0 = arith.constant 0 : i32
    %c0_i32_1 = arith.constant 0 : i32
    return %c0_i32, %c0_i32_0 : i32, i32
  }
  func.func @transform_5(%arg0: i32) -> (i32, i32, i32) {
    %c0_i32 = arith.constant 0 : i32
    %c0_i32_0 = arith.constant 0 : i32
    %c0_i32_1 = arith.constant 0 : i32
    return %arg0, %c0_i32, %c0_i32_0 : i32, i32, i32
  }
}

</mosaic_0001>

<llo_original>
// kernel: cnn_forward.1
$region0: #{cnn_forward.1}
  #allocation0 [shape = 'u32[]', space=smem, size = 0x4, offset = 0x4, fixed_abs, tag = 'smem constant byte address 0x4 - core index']
  #allocation1 [shape = 'u32[144,128]{1,0:T(1,128)}', space=vmem, size = 0x12000, scoped, tag = 'internal scratch']
  %s0 = inlined_call_operand.vmem [shape: f32[2,64,8], index: 0, kind: input, shape index: {}]
  %s1 = inlined_call_operand.vmem [shape: f32[8,8,128], index: 1, kind: input, shape index: {}]
  %s2 = inlined_call_operand.vmem [shape: f32[1,128], index: 2, kind: input, shape index: {}]
  %s3 = inlined_call_operand.vmem [shape: f32[14,128,128], index: 3, kind: input, shape index: {}]
  %s4 = inlined_call_operand.vmem [shape: f32[1,128], index: 4, kind: input, shape index: {}]
  %s5 = inlined_call_operand.hbm [shape: f32[2,1,128], index: 5, kind: output, shape index: {}]
  %s6 = sld [smem:[#allocation0]]
  $region53: #{cnn_forward.1} parent=0
    _
  %s8 = ssub.s32 1, %s6
  %s9 = scalar_select 0, %s8, %s6
  $region1: #{cnn_forward.1} parent=0
    #allocation2 [shape = 'u8[1024]{0}', space=vmem, size = 0x400, scoped, tag = 'output window, operand 0']
    #allocation3 [shape = 's32[2]{0}', space=sflag, size = 0x8, scoped, tag = 'scoped memory for cnn_forward.1']
    %10 = vsyncpa [#allocation3], 0
    %s11 = scalar_lea.sflag [#allocation3], 1
    %12 = vsyncpa %s11, 0
    loop: start=0, step=1, limit=4
    $region2: #{cnn_forward.1} parent=1 // loop_pre_header
      _
    $region3: #{cnn_forward.1} parent=1 // loop_header
      %s14 = sphi 0, %s18
      %p15 = scmp.ge.s32.totalorder %s14, 4
      %s24 = sphi 0, %s26
      %s27 = sphi 0, %s24
      %s28 = sphi 0, %s27
      %s44 = sphi 0, %s28
      %s48 = sphi 0, %s48
      %s50 = sphi 0, %s48
      %s51 = sphi 0, %s50
      %s65 = sphi 0, %s51
      %s69 = sphi 0, %s69
      %s71 = sphi 0, %s69
      %s72 = sphi 0, %s71
      %s86 = sphi 0, %s72
      %s90 = sphi 0, %s90
      %s92 = sphi 0, %s90
      %s93 = sphi 0, %s92
      %s107 = sphi 0, %s93
      %s111 = sphi 0, %s111
      %s113 = sphi 0, %s111
      %s114 = sphi 0, %s113
      %s128 = sphi 0, %s114
      %s134 = sphi 0, %s136
      %s137 = sphi 0, %s134
      %s138 = sphi 0, %s137
      %s154 = sphi 0, %s138
    $region4: #{cnn_forward.1} parent=1 // loop_header_branch
      %17 = sbr.rel (%p15) target = $region8
    $region5: #{cnn_forward.1} parent=1 // loop_body
      %s19 = ssub.s32 %s14, 1
      %s20 = ssub.s32 %s14, 2
      %s21 = sadd.s32 %s14, 1
      %s22 = ssub.s32 %s14, %s21
      %p23 = scmp.eq.s32.totalorder %s22, 0
      %s25 = sadd.s32 %s24, 1
      %s26 = scalar_select %p23, %s24, %s25
      %p29 = pneg %p23
      %p30 = scmp.eq.s32.totalorder %s14, 1
      %p31 = por %p29, %p30
      %p32 = scmp.ne.s32.totalorder %s24, %s27
      %p33 = scmp.eq.s32.totalorder %s14, 0
      %p34 = por %p32, %p33
      %p35 = scmp.ne.s32.totalorder %s24, %s27
      %p36 = scmp.eq.s32.totalorder %s19, 1
      %p37 = por %p35, %p36
      %p38 = scmp.ne.s32.totalorder %s27, %s28
      %p39 = scmp.eq.s32.totalorder %s19, 0
      %p40 = por %p38, %p39
      %p41 = scmp.ne.s32.totalorder %s27, %s28
      %p42 = scmp.eq.s32.totalorder %s20, 1
      %p43 = por %p41, %p42
      %p45 = scmp.ne.s32.totalorder %s28, %s44
      %p46 = scmp.eq.s32.totalorder %s20, 0
      %p47 = por %p45, %p46
      %s49 = sadd.s32 %s48, 1
      %p52 = scmp.eq.s32.totalorder %s14, 1
      %p53 = scmp.ne.s32.totalorder %s48, %s50
      %p54 = scmp.eq.s32.totalorder %s14, 0
      %p55 = por %p53, %p54
      %p56 = scmp.ne.s32.totalorder %s48, %s50
      %p57 = scmp.eq.s32.totalorder %s19, 1
      %p58 = por %p56, %p57
      %p59 = scmp.ne.s32.totalorder %s50, %s51
      %p60 = scmp.eq.s32.totalorder %s19, 0
      %p61 = por %p59, %p60
      %p62 = scmp.ne.s32.totalorder %s50, %s51
      %p63 = scmp.eq.s32.totalorder %s20, 1
      %p64 = por %p62, %p63
      %p66 = scmp.ne.s32.totalorder %s51, %s65
      %p67 = scmp.eq.s32.totalorder %s20, 0
      %p68 = por %p66, %p67
      %s70 = sadd.s32 %s69, 1
      %p73 = scmp.eq.s32.totalorder %s14, 1
      %p74 = scmp.ne.s32.totalorder %s69, %s71
      %p75 = scmp.eq.s32.totalorder %s14, 0
      %p76 = por %p74, %p75
      %p77 = scmp.ne.s32.totalorder %s69, %s71
      %p78 = scmp.eq.s32.totalorder %s19, 1
      %p79 = por %p77, %p78
      %p80 = scmp.ne.s32.totalorder %s71, %s72
      %p81 = scmp.eq.s32.totalorder %s19, 0
      %p82 = por %p80, %p81
      %p83 = scmp.ne.s32.totalorder %s71, %s72
      %p84 = scmp.eq.s32.totalorder %s20, 1
      %p85 = por %p83, %p84
      %p87 = scmp.ne.s32.totalorder %s72, %s86
      %p88 = scmp.eq.s32.totalorder %s20, 0
      %p89 = por %p87, %p88
      %s91 = sadd.s32 %s90, 1
      %p94 = scmp.eq.s32.totalorder %s14, 1
      %p95 = scmp.ne.s32.totalorder %s90, %s92
      %p96 = scmp.eq.s32.totalorder %s14, 0
      %p97 = por %p95, %p96
      %p98 = scmp.ne.s32.totalorder %s90, %s92
      %p99 = scmp.eq.s32.totalorder %s19, 1
      %p100 = por %p98, %p99
      %p101 = scmp.ne.s32.totalorder %s92, %s93
      %p102 = scmp.eq.s32.totalorder %s19, 0
      %p103 = por %p101, %p102
      %p104 = scmp.ne.s32.totalorder %s92, %s93
      %p105 = scmp.eq.s32.totalorder %s20, 1
      %p106 = por %p104, %p105
      %p108 = scmp.ne.s32.totalorder %s93, %s107
      %p109 = scmp.eq.s32.totalorder %s20, 0
      %p110 = por %p108, %p109
      %s112 = sadd.s32 %s111, 1
      %p115 = scmp.eq.s32.totalorder %s14, 1
      %p116 = scmp.ne.s32.totalorder %s111, %s113
      %p117 = scmp.eq.s32.totalorder %s14, 0
      %p118 = por %p116, %p117
      %p119 = scmp.ne.s32.totalorder %s111, %s113
      %p120 = scmp.eq.s32.totalorder %s19, 1
      %p121 = por %p119, %p120
      %p122 = scmp.ne.s32.totalorder %s113, %s114
      %p123 = scmp.eq.s32.totalorder %s19, 0
      %p124 = por %p122, %p123
      %p125 = scmp.ne.s32.totalorder %s113, %s114
      %p126 = scmp.eq.s32.totalorder %s20, 1
      %p127 = por %p125, %p126
      %p129 = scmp.ne.s32.totalorder %s114, %s128
      %p130 = scmp.eq.s32.totalorder %s20, 0
      %p131 = por %p129, %p130
      %s132 = ssub.s32 %s14, %s21
      %p133 = scmp.eq.s32.totalorder %s132, 0
      %s135 = sadd.s32 %s134, 1
      %s136 = scalar_select %p133, %s134, %s135
      %p139 = pneg %p133
      %p140 = scmp.eq.s32.totalorder %s14, 1
      %p141 = por %p139, %p140
      %p142 = scmp.ne.s32.totalorder %s134, %s137
      %p143 = scmp.eq.s32.totalorder %s14, 0
      %p144 = por %p142, %p143
      %p145 = scmp.ne.s32.totalorder %s134, %s137
      %p146 = scmp.eq.s32.totalorder %s19, 1
      %p147 = por %p145, %p146
      %p148 = scmp.ne.s32.totalorder %s137, %s138
      %p149 = scmp.eq.s32.totalorder %s19, 0
      %p150 = por %p148, %p149
      %p151 = scmp.ne.s32.totalorder %s137, %s138
      %p152 = scmp.eq.s32.totalorder %s20, 1
      %p153 = por %p151, %p152
      %p155 = scmp.ne.s32.totalorder %s138, %s154
      %p156 = scmp.eq.s32.totalorder %s20, 0
      %p157 = por %p155, %p156
      %p158 = scmp.le.s32.totalorder 1, %s14
      %p159 = scmp.lt.s32.totalorder %s14, 3
      %p160 = pnand %p158, %p159
      %p161 = pneg %p160
      // Predicated region
      $region9: #{cnn_forward.1} parent=5 // pred_check
        _
      $region10: #{cnn_forward.1} parent=5 // pred_check_branch
        %163 = sbr.rel (%p160) target = $region12
      $region11: #{cnn_forward.1} parent=5 // pred_region
        %s164 = ssub.s32 %s14, 1
        // Predicated region
        $region13: #{cnn_forward.1} parent=11 // pred_check
          %p165 = pneg %p61
        $region14: #{cnn_forward.1} parent=11 // pred_check_branch
          %167 = sbr.rel (%p165) target = $region16
        $region15: #{cnn_forward.1} parent=11 // pred_region
          _
        $region16: #{cnn_forward.1} parent=11 // pred_fallthru
          _
        // Predicated region
        $region17: #{cnn_forward.1} parent=11 // pred_check
          %p168 = pneg %p82
        $region18: #{cnn_forward.1} parent=11 // pred_check_branch
          %170 = sbr.rel (%p168) target = $region20
        $region19: #{cnn_forward.1} parent=11 // pred_region
          _
        $region20: #{cnn_forward.1} parent=11 // pred_fallthru
          _
        // Predicated region
        $region21: #{cnn_forward.1} parent=11 // pred_check
          %p171 = pneg %p103
        $region22: #{cnn_forward.1} parent=11 // pred_check_branch
          %173 = sbr.rel (%p171) target = $region24
        $region23: #{cnn_forward.1} parent=11 // pred_region
          _
        $region24: #{cnn_forward.1} parent=11 // pred_fallthru
          _
        // Predicated region
        $region25: #{cnn_forward.1} parent=11 // pred_check
          %p174 = pneg %p124
        $region26: #{cnn_forward.1} parent=11 // pred_check_branch
          %176 = sbr.rel (%p174) target = $region28
        $region27: #{cnn_forward.1} parent=11 // pred_region
          _
        $region28: #{cnn_forward.1} parent=11 // pred_fallthru
          _
      $region12: #{cnn_forward.1} parent=5 // pred_fallthru
        _
      %p177 = scmp.lt.s32.totalorder %s14, 2
      // Predicated region
      $region29: #{cnn_forward.1} parent=5 // pred_check
        %p178 = pneg %p177
      $region30: #{cnn_forward.1} parent=5 // pred_check_branch
        %180 = sbr.rel (%p178) target = $region32
      $region31: #{cnn_forward.1} parent=5 // pred_region
        // Predicated region
        $region33: #{cnn_forward.1} parent=31 // pred_check
          %p181 = pneg %p34
        $region34: #{cnn_forward.1} parent=31 // pred_check_branch
          %183 = sbr.rel (%p181) target = $region36
        $region35: #{cnn_forward.1} parent=31 // pred_region
          %p184 = scmp.lt.s32.totalorder %s14, 1
          %s185 = scalar_select %p184, %s14, 1
          %s186 = smul.addr %s185, 8
          %s187 = smul.addr %s186, 8
          %s188 = scalar_lea.vmem %s0, %s187
        $region36: #{cnn_forward.1} parent=31 // pred_fallthru
          _
      $region32: #{cnn_forward.1} parent=5 // pred_fallthru
        _
      %p189 = scmp.le.s32.totalorder 1, %s14
      %p190 = scmp.lt.s32.totalorder %s14, 3
      %p191 = pnand %p189, %p190
      %p192 = pneg %p191
      // Predicated region
      $region37: #{cnn_forward.1} parent=5 // pred_check
        _
      $region38: #{cnn_forward.1} parent=5 // pred_check_branch
        %194 = sbr.rel (%p191) target = $region40
      $region39: #{cnn_forward.1} parent=5 // pred_region
        %s195 = ssub.s32 %s14, 1
        %p196 = scmp.lt.s32.totalorder %s19, 1
        %s197 = scalar_select %p196, %s19, 1
        %s198 = smul.addr %s197, 8
        %s199 = smul.addr %s198, 8
        %s200 = scalar_lea.vmem %s0, %s199
        %p201 = pneg %p40
        %p202 = pneg %p37
        %p203 = pneg %p61
        %p204 = pneg %p58
        %p205 = pneg %p82
        %p206 = pneg %p79
        %p207 = pneg %p103
        %p208 = pneg %p100
        %p209 = pneg %p124
        %p210 = pneg %p121
        %p211 = pneg %p150
        %p212 = pneg %p147
        %s213 = sand.u32 %s137, 1
        %s214 = scalar_lea.sflag [#allocation3], %s213
        %s215 = sand.u32 %s137, 1
        %s216 = scalar_lea.vmem [#allocation2], %s215
        %p217 = scmp.lt.s32.totalorder %s19, 1
        %s218 = scalar_select %p217, %s19, 1
        %s219 = smul.addr %s218, 8
        %s220 = smul.addr %s219, 8
        %s221 = scalar_lea.vmem %s0, %s220
        %v222 = vld [vmem:[%s221] sm:$0xff]
        %v223 = vld [vmem:[%s221 + $0x8] sm:$0xff]
        %v224 = vld [vmem:[%s221 + $0x10] sm:$0xff]
        %v225 = vld [vmem:[%s221 + $0x18] sm:$0xff]
        %v226 = vld [vmem:[%s221 + $0x20] sm:$0xff]
        %v227 = vld [vmem:[%s221 + $0x28] sm:$0xff]
        %v228 = vld [vmem:[%s221 + $0x30] sm:$0xff]
        %v229 = vld [vmem:[%s1] sm:$0xff]
        %v230 = vld [vmem:[%s221 + $0x1] sm:$0xff]
        %v231 = vld [vmem:[%s221 + $0x9] sm:$0xff]
        %v232 = vld [vmem:[%s221 + $0x11] sm:$0xff]
        %v233 = vld [vmem:[%s221 + $0x19] sm:$0xff]
        %v234 = vld [vmem:[%s221 + $0x21] sm:$0xff]
        %v235 = vld [vmem:[%s221 + $0x29] sm:$0xff]
        %v236 = vld [vmem:[%s221 + $0x31] sm:$0xff]
        %s237 = scalar_lea.vmem %s1, 8
        %v238 = vld [vmem:[%s237] sm:$0xff]
        %vm239 = vcmask 64512
        %v241 = vsel %vm239, %v230, 0
        %v244 = vsel %vm239, %v231, 0
        %v247 = vsel %vm239, %v232, 0
        %v250 = vsel %vm239, %v233, 0
        %v253 = vsel %vm239, %v234, 0
        %v256 = vsel %vm239, %v235, 0
        %v259 = vsel %vm239, %v236, 0
        %261 = vmatprep.subr.mxu0 0.0
        %262 = vmatpush1.msra.mxu0 %v238
        %263 = vmatprep.subr.mxu0 0.0
        %264 = vmatpush1.msra.mxu0 0.0
        %265 = vmatprep.subr.mxu0 0.0
        %266 = vmatpush1.msra.mxu0 0.0
        %267 = vmatprep.subr.mxu0 0.0
        %268 = vmatpush1.msra.mxu0 0.0
        %269 = vmatprep.subr.mxu0 0.0
        %270 = vmatpush1.msra.mxu0 0.0
        %271 = vmatprep.subr.mxu0 0.0
        %272 = vmatpush1.msra.mxu0 0.0
        %273 = vmatprep.subr.mxu0 0.0
        %274 = vmatpush1.msra.mxu0 0.0
        %275 = vmatprep.subr.mxu0 0.0
        %276 = vmatpush1.msra.mxu0 0.0
        %277 = vmatprep.subr.mxu0 0.0
        %278 = vmatpush1.msra.mxu0 0.0
        %279 = vmatprep.subr.mxu0 0.0
        %280 = vmatpush1.msra.mxu0 0.0
        %281 = vmatprep.subr.mxu0 0.0
        %282 = vmatpush1.msra.mxu0 0.0
        %283 = vmatprep.subr.mxu0 0.0
        %284 = vmatpush1.msra.mxu0 0.0
        %285 = vmatprep.subr.mxu0 0.0
        %286 = vmatpush1.msra.mxu0 0.0
        %287 = vmatprep.subr.mxu0 0.0
        %288 = vmatpush1.msra.mxu0 0.0
        %289 = vmatprep.subr.mxu0 0.0
        %290 = vmatpush1.msra.mxu0 0.0
        %291 = vmatprep.subr.mxu0 0.0
        %292 = vmatpush1.msra.mxu0 0.0
        %293 = vmatprep.subr.mxu0 0.0
        %294 = vmatpush1.msra.mxu0 0.0
        %295 = vmatprep.subr.mxu0 0.0
        %296 = vmatpush1.msra.mxu0 0.0
        %297 = vmatprep.subr.mxu0 0.0
        %298 = vmatpush1.msra.mxu0 0.0
        %299 = vmatprep.subr.mxu0 0.0
        %300 = vmatpush1.msra.mxu0 0.0
        %301 = vmatprep.subr.mxu0 0.0
        %302 = vmatpush1.msra.mxu0 0.0
        %303 = vmatprep.subr.mxu0 0.0
        %304 = vmatpush1.msra.mxu0 0.0
        %305 = vmatprep.subr.mxu0 0.0
        %306 = vmatpush1.msra.mxu0 0.0
        %307 = vmatprep.subr.mxu0 0.0
        %308 = vmatpush1.msra.mxu0 0.0
        %309 = vmatprep.subr.mxu0 0.0
        %310 = vmatpush1.msra.mxu0 0.0
        %311 = vmatprep.subr.mxu0 0.0
        %312 = vmatpush1.msra.mxu0 0.0
        %313 = vmatprep.subr.mxu0 0.0
        %314 = vmatpush1.msra.mxu0 0.0
        %315 = vmatprep.subr.mxu0 0.0
        %316 = vmatpush1.msra.mxu0 0.0
        %317 = vmatprep.subr.mxu0 0.0
        %318 = vmatpush1.msra.mxu0 0.0
        %319 = vmatprep.subr.mxu0 0.0
        %320 = vmatpush1.msra.mxu0 0.0
        %321 = vmatprep.subr.mxu0 0.0
        %322 = vmatpush1.msra.mxu0 0.0
        %323 = vmatprep.subr.mxu0 0.0
        %324 = vmatpush1.msra.mxu0 0.0
        %325 = vmatprep.mubr.f32.mxu0 0.0
        %326 = vmatmul.mubr.f32.gmra.mrb[0].mxu0 %v241
        %v327 = vpop.f32.mrb[0].mxu0
        %v328 = vadd.f32 0.0, %v327
        %v329 = vpop.f32.mrb[0].mxu0
        %330 = vmatprep.mubr.f32.mxu0 0.0
        %331 = vmatmul.mubr.f32.gmra.mrb[0].mxu0 %v244
        %v332 = vpop.f32.mrb[0].mxu0
        %v333 = vadd.f32 0.0, %v332
        %v334 = vpop.f32.mrb[0].mxu0
        %335 = vmatprep.mubr.f32.mxu0 0.0
        %336 = vmatmul.mubr.f32.gmra.mrb[0].mxu0 %v247
        %v337 = vpop.f32.mrb[0].mxu0
        %v338 = vadd.f32 0.0, %v337
        %v339 = vpop.f32.mrb[0].mxu0
        %340 = vmatprep.mubr.f32.mxu0 0.0
        %341 = vmatmul.mubr.f32.gmra.mrb[0].mxu0 %v250
        %v342 = vpop.f32.mrb[0].mxu0
        %v343 = vadd.f32 0.0, %v342
        %v344 = vpop.f32.mrb[0].mxu0
        %345 = vmatprep.mubr.f32.mxu0 0.0
        %346 = vmatmul.mubr.f32.gmra.mrb[0].mxu0 %v253
        %v347 = vpop.f32.mrb[0].mxu0
        %v348 = vadd.f32 0.0, %v347
        %v349 = vpop.f32.mrb[0].mxu0
        %350 = vmatprep.mubr.f32.mxu0 0.0
        %351 = vmatmul.mubr.f32.gmra.mrb[0].mxu0 %v256
        %v352 = vpop.f32.mrb[0].mxu0
        %v353 = vadd.f32 0.0, %v352
        %v354 = vpop.f32.mrb[0].mxu0
        %355 = vmatprep.mubr.f32.mxu0 0.0
        %356 = vmatmul.mubr.f32.gmra.mrb[0].mxu0 %v259
        %v357 = vpop.f32.mrb[0].mxu0
        %v358 = vadd.f32 0.0, %v357
        %v359 = vpop.f32.mrb[0].mxu0
        %360 = vdwg.mxu0
        %v362 = vsel %vm239, %v222, 0
        %v365 = vsel %vm239, %v223, 0
        %v368 = vsel %vm239, %v224, 0
        %v371 = vsel %vm239, %v225, 0
        %v374 = vsel %vm239, %v226, 0
        %v377 = vsel %vm239, %v227, 0
        %v380 = vsel %vm239, %v228, 0
        %382 = vmatprep.subr.mxu0 0.0
        %383 = vmatpush1.msra.mxu0 %v229
        %384 = vmatprep.subr.mxu0 0.0
        %385 = vmatpush1.msra.mxu0 0.0
        %386 = vmatprep.subr.mxu0 0.0
        %387 = vmatpush1.msra.mxu0 0.0
        %388 = vmatprep.subr.mxu0 0.0
        %389 = vmatpush1.msra.mxu0 0.0
        %390 = vmatprep.subr.mxu0 0.0
        %391 = vmatpush1.msra.mxu0 0.0
        %392 = vmatprep.subr.mxu0 0.0
        %393 = vmatpush1.msra.mxu0 0.0
        %394 = vmatprep.subr.mxu0 0.0
        %395 = vmatpush1.msra.mxu0 0.0
        %396 = vmatprep.subr.mxu0 0.0
        %397 = vmatpush1.msra.mxu0 0.0
        %398 = vmatprep.subr.mxu0 0.0
        %399 = vmatpush1.msra.mxu0 0.0
        %400 = vmatprep.subr.mxu0 0.0
        %401 = vmatpush1.msra.mxu0 0.0
        %402 = vmatprep.subr.mxu0 0.0
        %403 = vmatpush1.msra.mxu0 0.0
        %404 = vmatprep.subr.mxu0 0.0
        %405 = vmatpush1.msra.mxu0 0.0
        %406 = vmatprep.subr.mxu0 0.0
        %407 = vmatpush1.msra.mxu0 0.0
        %408 = vmatprep.subr.mxu0 0.0
        %409 = vmatpush1.msra.mxu0 0.0
        %410 = vmatprep.subr.mxu0 0.0
        %411 = vmatpush1.msra.mxu0 0.0
        %412 = vmatprep.subr.mxu0 0.0
        %413 = vmatpush1.msra.mxu0 0.0
        %414 = vmatprep.subr.mxu0 0.0
        %415 = vmatpush1.msra.mxu0 0.0
        %416 = vmatprep.subr.mxu0 0.0
        %417 = vmatpush1.msra.mxu0 0.0
        %418 = vmatprep.subr.mxu0 0.0
        %419 = vmatpush1.msra.mxu0 0.0
        %420 = vmatprep.subr.mxu0 0.0
        %421 = vmatpush1.msra.mxu0 0.0
        %422 = vmatprep.subr.mxu0 0.0
        %423 = vmatpush1.msra.mxu0 0.0
        %424 = vmatprep.subr.mxu0 0.0
        %425 = vmatpush1.msra.mxu0 0.0
        %426 = vmatprep.subr.mxu0 0.0
        %427 = vmatpush1.msra.mxu0 0.0
        %428 = vmatprep.subr.mxu0 0.0
        %429 = vmatpush1.msra.mxu0 0.0
        %430 = vmatprep.subr.mxu0 0.0
        %431 = vmatpush1.msra.mxu0 0.0
        %432 = vmatprep.subr.mxu0 0.0
        %433 = vmatpush1.msra.mxu0 0.0
        %434 = vmatprep.subr.mxu0 0.0
        %435 = vmatpush1.msra.mxu0 0.0
        %436 = vmatprep.subr.mxu0 0.0
        %437 = vmatpush1.msra.mxu0 0.0
        %438 = vmatprep.subr.mxu0 0.0
        %439 = vmatpush1.msra.mxu0 0.0
        %440 = vmatprep.subr.mxu0 0.0
        %441 = vmatpush1.msra.mxu0 0.0
        %442 = vmatprep.subr.mxu0 0.0
        %443 = vmatpush1.msra.mxu0 0.0
        %444 = vmatprep.subr.mxu0 0.0
        %445 = vmatpush1.msra.mxu0 0.0
        %446 = vmatprep.mubr.f32.mxu0 0.0
        %447 = vmatmul.mubr.f32.gmra.mrb[0].mxu0 %v362
        %v448 = vpop.f32.mrb[0].mxu0
        %v449 = vadd.f32 %v328, %v448
        %v450 = vpop.f32.mrb[0].mxu0
        %451 = vmatprep.mubr.f32.mxu0 0.0
        %452 = vmatmul.mubr.f32.gmra.mrb[0].mxu0 %v365
        %v453 = vpop.f32.mrb[0].mxu0
        %v454 = vadd.f32 %v333, %v453
        %v455 = vpop.f32.mrb[0].mxu0
        %456 = vmatprep.mubr.f32.mxu0 0.0
        %457 = vmatmul.mubr.f32.gmra.mrb[0].mxu0 %v368
        %v458 = vpop.f32.mrb[0].mxu0
        %v459 = vadd.f32 %v338, %v458
        %v460 = vpop.f32.mrb[0].mxu0
        %461 = vmatprep.mubr.f32.mxu0 0.0
        %462 = vmatmul.mubr.f32.gmra.mrb[0].mxu0 %v371
        %v463 = vpop.f32.mrb[0].mxu0
        %v464 = vadd.f32 %v343, %v463
        %v465 = vpop.f32.mrb[0].mxu0
        %466 = vmatprep.mubr.f32.mxu0 0.0
        %467 = vmatmul.mubr.f32.gmra.mrb[0].mxu0 %v374
        %v468 = vpop.f32.mrb[0].mxu0
        %v469 = vadd.f32 %v348, %v468
        %v470 = vpop.f32.mrb[0].mxu0
        %471 = vmatprep.mubr.f32.mxu0 0.0
        %472 = vmatmul.mubr.f32.gmra.mrb[0].mxu0 %v377
        %v473 = vpop.f32.mrb[0].mxu0
        %v474 = vadd.f32 %v353, %v473
        %v475 = vpop.f32.mrb[0].mxu0
        %476 = vmatprep.mubr.f32.mxu0 0.0
        %477 = vmatmul.mubr.f32.gmra.mrb[0].mxu0 %v380
        %v478 = vpop.f32.mrb[0].mxu0
        %v479 = vadd.f32 %v358, %v478
        %v480 = vpop.f32.mrb[0].mxu0
        %481 = vdwg.mxu0
        %v482 = vld [vmem:[%s221 + $0x2] sm:$0xff]
        %v483 = vld [vmem:[%s221 + $0xa] sm:$0xff]
        %v484 = vld [vmem:[%s221 + $0x12] sm:$0xff]
        %v485 = vld [vmem:[%s221 + $0x1a] sm:$0xff]
        %v486 = vld [vmem:[%s221 + $0x22] sm:$0xff]
        %v487 = vld [vmem:[%s221 + $0x2a] sm:$0xff]
        %v488 = vld [vmem:[%s221 + $0x32] sm:$0xff]
        %s489 = scalar_lea.vmem %s1, 16
        %v490 = vld [vmem:[%s489] sm:$0xff]
        %v492 = vsel %vm239, %v482, 0
        %v495 = vsel %vm239, %v483, 0
        %v498 = vsel %vm239, %v484, 0
        %v501 = vsel %vm239, %v485, 0
        %v504 = vsel %vm239, %v486, 0
        %v507 = vsel %vm239, %v487, 0
        %v510 = vsel %vm239, %v488, 0
        %512 = vmatprep.subr.mxu0 0.0
        %513 = vmatpush1.msra.mxu0 %v490
        %514 = vmatprep.subr.mxu0 0.0
        %515 = vmatpush1.msra.mxu0 0.0
        %516 = vmatprep.subr.mxu0 0.0
        %517 = vmatpush1.msra.mxu0 0.0
        %518 = vmatprep.subr.mxu0 0.0
        %519 = vmatpush1.msra.mxu0 0.0
        %520 = vmatprep.subr.mxu0 0.0
        %521 = vmatpush1.msra.mxu0 0.0
        %522 = vmatprep.subr.mxu0 0.0
        %523 = vmatpush1.msra.mxu0 0.0
        %524 = vmatprep.subr.mxu0 0.0
        %525 = vmatpush1.msra.mxu0 0.0
        %526 = vmatprep.subr.mxu0 0.0
        %527 = vmatpush1.msra.mxu0 0.0
        %528 = vmatprep.subr.mxu0 0.0
        %529 = vmatpush1.msra.mxu0 0.0
        %530 = vmatprep.subr.mxu0 0.0
        %531 = vmatpush1.msra.mxu0 0.0
        %532 = vmatprep.subr.mxu0 0.0
        %533 = vmatpush1.msra.mxu0 0.0
        %534 = vmatprep.subr.mxu0 0.0
        %535 = vmatpush1.msra.mxu0 0.0
        %536 = vmatprep.subr.mxu0 0.0
        %537 = vmatpush1.msra.mxu0 0.0
        %538 = vmatprep.subr.mxu0 0.0
        %539 = vmatpush1.msra.mxu0 0.0
        %540 = vmatprep.subr.mxu0 0.0
        %541 = vmatpush1.msra.mxu0 0.0
        %542 = vmatprep.subr.mxu0 0.0
        %543 = vmatpush1.msra.mxu0 0.0
        %544 = vmatprep.subr.mxu0 0.0
        %545 = vmatpush1.msra.mxu0 0.0
        %546 = vmatprep.subr.mxu0 0.0
        %547 = vmatpush1.msra.mxu0 0.0
        %548 = vmatprep.subr.mxu0 0.0
        %549 = vmatpush1.msra.mxu0 0.0
        %550 = vmatprep.subr.mxu0 0.0
        %551 = vmatpush1.msra.mxu0 0.0
        %552 = vmatprep.subr.mxu0 0.0
        %553 = vmatpush1.msra.mxu0 0.0
        %554 = vmatprep.subr.mxu0 0.0
        %555 = vmatpush1.msra.mxu0 0.0
        %556 = vmatprep.subr.mxu0 0.0
        %557 = vmatpush1.msra.mxu0 0.0
        %558 = vmatprep.subr.mxu0 0.0
        %559 = vmatpush1.msra.mxu0 0.0
        %560 = vmatprep.subr.mxu0 0.0
        %561 = vmatpush1.msra.mxu0 0.0
        %562 = vmatprep.subr.mxu0 0.0
        %563 = vmatpush1.msra.mxu0 0.0
        %564 = vmatprep.subr.mxu0 0.0
        %565 = vmatpush1.msra.mxu0 0.0
        %566 = vmatprep.subr.mxu0 0.0
        %567 = vmatpush1.msra.mxu0 0.0
        %568 = vmatprep.subr.mxu0 0.0
        %569 = vmatpush1.msra.mxu0 0.0
        %570 = vmatprep.subr.mxu0 0.0
        %571 = vmatpush1.msra.mxu0 0.0
        %572 = vmatprep.subr.mxu0 0.0
        %573 = vmatpush1.msra.mxu0 0.0
        %574 = vmatprep.subr.mxu0 0.0
        %575 = vmatpush1.msra.mxu0 0.0
        %576 = vmatprep.mubr.f32.mxu0 0.0
        %577 = vmatmul.mubr.f32.gmra.mrb[0].mxu0 %v492
        %v578 = vpop.f32.mrb[0].mxu0
        %v579 = vadd.f32 0.0, %v578
        %v580 = vpop.f32.mrb[0].mxu0
        %581 = vmatprep.mubr.f32.mxu0 0.0
        %582 = vmatmul.mubr.f32.gmra.mrb[0].mxu0 %v495
        %v583 = vpop.f32.mrb[0].mxu0
        %v584 = vadd.f32 0.0, %v583
        %v585 = vpop.f32.mrb[0].mxu0
        %586 = vmatprep.mubr.f32.mxu0 0.0
        %587 = vmatmul.mubr.f32.gmra.mrb[0].mxu0 %v498
        %v588 = vpop.f32.mrb[0].mxu0
        %v589 = vadd.f32 0.0, %v588
        %v590 = vpop.f32.mrb[0].mxu0
        %591 = vmatprep.mubr.f32.mxu0 0.0
        %592 = vmatmul.mubr.f32.gmra.mrb[0].mxu0 %v501
        %v593 = vpop.f32.mrb[0].mxu0
        %v594 = vadd.f32 0.0, %v593
        %v595 = vpop.f32.mrb[0].mxu0
        %596 = vmatprep.mubr.f32.mxu0 0.0
        %597 = vmatmul.mubr.f32.gmra.mrb[0].mxu0 %v504
        %v598 = vpop.f32.mrb[0].mxu0
        %v599 = vadd.f32 0.0, %v598
        %v600 = vpop.f32.mrb[0].mxu0
        %601 = vmatprep.mubr.f32.mxu0 0.0
        %602 = vmatmul.mubr.f32.gmra.mrb[0].mxu0 %v507
        %v603 = vpop.f32.mrb[0].mxu0
        %v604 = vadd.f32 0.0, %v603
        %v605 = vpop.f32.mrb[0].mxu0
        %606 = vmatprep.mubr.f32.mxu0 0.0
        %607 = vmatmul.mubr.f32.gmra.mrb[0].mxu0 %v510
        %v608 = vpop.f32.mrb[0].mxu0
        %v609 = vadd.f32 0.0, %v608
        %v610 = vpop.f32.mrb[0].mxu0
        %611 = vdwg.mxu0
        %v612 = vadd.f32 %v449, %v579
        %v613 = vadd.f32 %v454, %v584
        %v614 = vadd.f32 %v459, %v589
        %v615 = vadd.f32 %v464, %v594
        %v616 = vadd.f32 %v469, %v599
        %v617 = vadd.f32 %v474, %v604
        %v618 = vadd.f32 %v479, %v609
        %v619 = vld [vmem:[%s221 + $0x3] sm:$0xff]
        %v620 = vld [vmem:[%s221 + $0xb] sm:$0xff]
        %v621 = vld [vmem:[%s221 + $0x13] sm:$0xff]
        %v622 = vld [vmem:[%s221 + $0x1b] sm:$0xff]
        %v623 = vld [vmem:[%s221 + $0x23] sm:$0xff]
        %v624 = vld [vmem:[%s221 + $0x2b] sm:$0xff]
        %v625 = vld [vmem:[%s221 + $0x33] sm:$0xff]
        %s626 = scalar_lea.vmem %s1, 24
        %v627 = vld [vmem:[%s626] sm:$0xff]
        %v629 = vsel %vm239, %v619, 0
        %v632 = vsel %vm239, %v620, 0
        %v635 = vsel %vm239, %v621, 0
        %v638 = vsel %vm239, %v622, 0
        %v641 = vsel %vm239, %v623, 0
        %v644 = vsel %vm239, %v624, 0
        %v647 = vsel %vm239, %v625, 0
        %649 = vmatprep.subr.mxu0 0.0
        %650 = vmatpush1.msra.mxu0 %v627
        %651 = vmatprep.subr.mxu0 0.0
        %652 = vmatpush1.msra.mxu0 0.0
        %653 = vmatprep.subr.mxu0 0.0
        %654 = vmatpush1.msra.mxu0 0.0
        %655 = vmatprep.subr.mxu0 0.0
        %656 = vmatpush1.msra.mxu0 0.0
        %657 = vmatprep.subr.mxu0 0.0
        %658 = vmatpush1.msra.mxu0 0.0
        %659 = vmatprep.subr.mxu0 0.0
        %660 = vmatpush1.msra.mxu0 0.0
        %661 = vmatprep.subr.mxu0 0.0
        %662 = vmatpush1.msra.mxu0 0.0
        %663 = vmatprep.subr.mxu0 0.0
        %664 = vmatpush1.msra.mxu0 0.0
        %665 = vmatprep.subr.mxu0 0.0
        %666 = vmatpush1.msra.mxu0 0.0
        %667 = vmatprep.subr.mxu0 0.0
        %668 = vmatpush1.msra.mxu0 0.0
        %669 = vmatprep.subr.mxu0 0.0
        %670 = vmatpush1.msra.mxu0 0.0
        %671 = vmatprep.subr.mxu0 0.0
        %672 = vmatpush1.msra.mxu0 0.0
        %673 = vmatprep.subr.mxu0 0.0
        %674 = vmatpush1.msra.mxu0 0.0
        %675 = vmatprep.subr.mxu0 0.0
        %676 = vmatpush1.msra.mxu0 0.0
        %677 = vmatprep.subr.mxu0 0.0
        %678 = vmatpush1.msra.mxu0 0.0
        %679 = vmatprep.subr.mxu0 0.0
        %680 = vmatpush1.msra.mxu0 0.0
        %681 = vmatprep.subr.mxu0 0.0
        %682 = vmatpush1.msra.mxu0 0.0
        %683 = vmatprep.subr.mxu0 0.0
        %684 = vmatpush1.msra.mxu0 0.0
        %685 = vmatprep.subr.mxu0 0.0
        %686 = vmatpush1.msra.mxu0 0.0
        %687 = vmatprep.subr.mxu0 0.0
        %688 = vmatpush1.msra.mxu0 0.0
        %689 = vmatprep.subr.mxu0 0.0
        %690 = vmatpush1.msra.mxu0 0.0
        %691 = vmatprep.subr.mxu0 0.0
        %692 = vmatpush1.msra.mxu0 0.0
        %693 = vmatprep.subr.mxu0 0.0
        %694 = vmatpush1.msra.mxu0 0.0
        %695 = vmatprep.subr.mxu0 0.0
        %696 = vmatpush1.msra.mxu0 0.0
        %697 = vmatprep.subr.mxu0 0.0
        %698 = vmatpush1.msra.mxu0 0.0
        %699 = vmatprep.subr.mxu0 0.0
        %700 = vmatpush1.msra.mxu0 0.0
        %701 = vmatprep.subr.mxu0 0.0
        %702 = vmatpush1.msra.mxu0 0.0
        %703 = vmatprep.subr.mxu0 0.0
        %704 = vmatpush1.msra.mxu0 0.0
        %705 = vmatprep.subr.mxu0 0.0
        %706 = vmatpush1.msra.mxu0 0.0
        %707 = vmatprep.subr.mxu0 0.0
        %708 = vmatpush1.msra.mxu0 0.0
        %709 = vmatprep.subr.mxu0 0.0
        %710 = vmatpush1.msra.mxu0 0.0
        %711 = vmatprep.subr.mxu0 0.0
        %712 = vmatpush1.msra.mxu0 0.0
        %713 = vmatprep.mubr.f32.mxu0 0.0
        %714 = vmatmul.mubr.f32.gmra.mrb[0].mxu0 %v629
        %v715 = vpop.f32.mrb[0].mxu0
        %v716 = vadd.f32 0.0, %v715
        %v717 = vpop.f32.mrb[0].mxu0
        %718 = vmatprep.mubr.f32.mxu0 0.0
        %719 = vmatmul.mubr.f32.gmra.mrb[0].mxu0 %v632
        %v720 = vpop.f32.mrb[0].mxu0
        %v721 = vadd.f32 0.0, %v720
        %v722 = vpop.f32.mrb[0].mxu0
        %723 = vmatprep.mubr.f32.mxu0 0.0
        %724 = vmatmul.mubr.f32.gmra.mrb[0].mxu0 %v635
        %v725 = vpop.f32.mrb[0].mxu0
        %v726 = vadd.f32 0.0, %v725
        %v727 = vpop.f32.mrb[0].mxu0
        %728 = vmatprep.mubr.f32.mxu0 0.0
        %729 = vmatmul.mubr.f32.gmra.mrb[0].mxu0 %v638
        %v730 = vpop.f32.mrb[0].mxu0
        %v731 = vadd.f32 0.0, %v730
        %v732 = vpop.f32.mrb[0].mxu0
        %733 = vmatprep.mubr.f32.mxu0 0.0
        %734 = vmatmul.mubr.f32.gmra.mrb[0].mxu0 %v641
        %v735 = vpop.f32.mrb[0].mxu0
        %v736 = vadd.f32 0.0, %v735
        %v737 = vpop.f32.mrb[0].mxu0
        %738 = vmatprep.mubr.f32.mxu0 0.0
        %739 = vmatmul.mubr.f32.gmra.mrb[0].mxu0 %v644
        %v740 = vpop.f32.mrb[0].mxu0
        %v741 = vadd.f32 0.0, %v740
        %v742 = vpop.f32.mrb[0].mxu0
        %743 = vmatprep.mubr.f32.mxu0 0.0
        %744 = vmatmul.mubr.f32.gmra.mrb[0].mxu0 %v647
        %v745 = vpop.f32.mrb[0].mxu0
        %v746 = vadd.f32 0.0, %v745
        %v747 = vpop.f32.mrb[0].mxu0
        %748 = vdwg.mxu0
        %v749 = vadd.f32 %v612, %v716
        %v750 = vadd.f32 %v613, %v721
        %v751 = vadd.f32 %v614, %v726
        %v752 = vadd.f32 %v615, %v731
        %v753 = vadd.f32 %v616, %v736
        %v754 = vadd.f32 %v617, %v741
        %v755 = vadd.f32 %v618, %v746
        %v756 = vld [vmem:[%s221 + $0x4] sm:$0xff]
        %v757 = vld [vmem:[%s221 + $0xc] sm:$0xff]
        %v758 = vld [vmem:[%s221 + $0x14] sm:$0xff]
        %v759 = vld [vmem:[%s221 + $0x1c] sm:$0xff]
        %v760 = vld [vmem:[%s221 + $0x24] sm:$0xff]
        %v761 = vld [vmem:[%s221 + $0x2c] sm:$0xff]
        %v762 = vld [vmem:[%s221 + $0x34] sm:$0xff]
        %s763 = scalar_lea.vmem %s1, 32
        %v764 = vld [vmem:[%s763] sm:$0xff]
        %v766 = vsel %vm239, %v756, 0
        %v769 = vsel %vm239, %v757, 0
        %v772 = vsel %vm239, %v758, 0
        %v775 = vsel %vm239, %v759, 0
        %v778 = vsel %vm239, %v760, 0
        %v781 = vsel %vm239, %v761, 0
        %v784 = vsel %vm239, %v762, 0
        %786 = vmatprep.subr.mxu0 0.0
        %787 = vmatpush1.msra.mxu0 %v764
        %788 = vmatprep.subr.mxu0 0.0
        %789 = vmatpush1.msra.mxu0 0.0
        %790 = vmatprep.subr.mxu0 0.0
        %791 = vmatpush1.msra.mxu0 0.0
        %792 = vmatprep.subr.mxu0 0.0
        %793 = vmatpush1.msra.mxu0 0.0
        %794 = vmatprep.subr.mxu0 0.0
        %795 = vmatpush1.msra.mxu0 0.0
        %796 = vmatprep.subr.mxu0 0.0
        %797 = vmatpush1.msra.mxu0 0.0
        %798 = vmatprep.subr.mxu0 0.0
        %799 = vmatpush1.msra.mxu0 0.0
        %800 = vmatprep.subr.mxu0 0.0
        %801 = vmatpush1.msra.mxu0 0.0
        %802 = vmatprep.subr.mxu0 0.0
        %803 = vmatpush1.msra.mxu0 0.0
        %804 = vmatprep.subr.mxu0 0.0
        %805 = vmatpush1.msra.mxu0 0.0
        %806 = vmatprep.subr.mxu0 0.0
        %807 = vmatpush1.msra.mxu0 0.0
        %808 = vmatprep.subr.mxu0 0.0
        %809 = vmatpush1.msra.mxu0 0.0
        %810 = vmatprep.subr.mxu0 0.0
        %811 = vmatpush1.msra.mxu0 0.0
        %812 = vmatprep.subr.mxu0 0.0
        %813 = vmatpush1.msra.mxu0 0.0
        %814 = vmatprep.subr.mxu0 0.0
        %815 = vmatpush1.msra.mxu0 0.0
        %816 = vmatprep.subr.mxu0 0.0
        %817 = vmatpush1.msra.mxu0 0.0
        %818 = vmatprep.subr.mxu0 0.0
        %819 = vmatpush1.msra.mxu0 0.0
        %820 = vmatprep.subr.mxu0 0.0
        %821 = vmatpush1.msra.mxu0 0.0
        %822 = vmatprep.subr.mxu0 0.0
        %823 = vmatpush1.msra.mxu0 0.0
        %824 = vmatprep.subr.mxu0 0.0
        %825 = vmatpush1.msra.mxu0 0.0
        %826 = vmatprep.subr.mxu0 0.0
        %827 = vmatpush1.msra.mxu0 0.0
        %828 = vmatprep.subr.mxu0 0.0
        %829 = vmatpush1.msra.mxu0 0.0
        %830 = vmatprep.subr.mxu0 0.0
        %831 = vmatpush1.msra.mxu0 0.0
        %832 = vmatprep.subr.mxu0 0.0
        %833 = vmatpush1.msra.mxu0 0.0
        %834 = vmatprep.subr.mxu0 0.0
        %835 = vmatpush1.msra.mxu0 0.0
        %836 = vmatprep.subr.mxu0 0.0
        %837 = vmatpush1.msra.mxu0 0.0
        %838 = vmatprep.subr.mxu0 0.0
        %839 = vmatpush1.msra.mxu0 0.0
        %840 = vmatprep.subr.mxu0 0.0
        %841 = vmatpush1.msra.mxu0 0.0
        %842 = vmatprep.subr.mxu0 0.0
        %843 = vmatpush1.msra.mxu0 0.0
        %844 = vmatprep.subr.mxu0 0.0
        %845 = vmatpush1.msra.mxu0 0.0
        %846 = vmatprep.subr.mxu0 0.0
        %847 = vmatpush1.msra.mxu0 0.0
        %848 = vmatprep.subr.mxu0 0.0
        %849 = vmatpush1.msra.mxu0 0.0
        %850 = vmatprep.mubr.f32.mxu0 0.0
        %851 = vmatmul.mubr.f32.gmra.mrb[0].mxu0 %v766
        %v852 = vpop.f32.mrb[0].mxu0
        %v853 = vadd.f32 0.0, %v852
        %v854 = vpop.f32.mrb[0].mxu0
        %855 = vmatprep.mubr.f32.mxu0 0.0
        %856 = vmatmul.mubr.f32.gmra.mrb[0].mxu0 %v769
        %v857 = vpop.f32.mrb[0].mxu0
        %v858 = vadd.f32 0.0, %v857
        %v859 = vpop.f32.mrb[0].mxu0
        %860 = vmatprep.mubr.f32.mxu0 0.0
        %861 = vmatmul.mubr.f32.gmra.mrb[0].mxu0 %v772
        %v862 = vpop.f32.mrb[0].mxu0
        %v863 = vadd.f32 0.0, %v862
        %v864 = vpop.f32.mrb[0].mxu0
        %865 = vmatprep.mubr.f32.mxu0 0.0
        %866 = vmatmul.mubr.f32.gmra.mrb[0].mxu0 %v775
        %v867 = vpop.f32.mrb[0].mxu0
        %v868 = vadd.f32 0.0, %v867
        %v869 = vpop.f32.mrb[0].mxu0
        %870 = vmatprep.mubr.f32.mxu0 0.0
        %871 = vmatmul.mubr.f32.gmra.mrb[0].mxu0 %v778
        %v872 = vpop.f32.mrb[0].mxu0
        %v873 = vadd.f32 0.0, %v872
        %v874 = vpop.f32.mrb[0].mxu0
        %875 = vmatprep.mubr.f32.mxu0 0.0
        %876 = vmatmul.mubr.f32.gmra.mrb[0].mxu0 %v781
        %v877 = vpop.f32.mrb[0].mxu0
        %v878 = vadd.f32 0.0, %v877
        %v879 = vpop.f32.mrb[0].mxu0
        %880 = vmatprep.mubr.f32.mxu0 0.0
        %881 = vmatmul.mubr.f32.gmra.mrb[0].mxu0 %v784
        %v882 = vpop.f32.mrb[0].mxu0
        %v883 = vadd.f32 0.0, %v882
        %v884 = vpop.f32.mrb[0].mxu0
        %885 = vdwg.mxu0
        %v886 = vadd.f32 %v749, %v853
        %v887 = vadd.f32 %v750, %v858
        %v888 = vadd.f32 %v751, %v863
        %v889 = vadd.f32 %v752, %v868
        %v890 = vadd.f32 %v753, %v873
        %v891 = vadd.f32 %v754, %v878
        %v892 = vadd.f32 %v755, %v883
        %v893 = vld [vmem:[%s221 + $0x5] sm:$0xff]
        %v894 = vld [vmem:[%s221 + $0xd] sm:$0xff]
        %v895 = vld [vmem:[%s221 + $0x15] sm:$0xff]
        %v896 = vld [vmem:[%s221 + $0x1d] sm:$0xff]
        %v897 = vld [vmem:[%s221 + $0x25] sm:$0xff]
        %v898 = vld [vmem:[%s221 + $0x2d] sm:$0xff]
        %v899 = vld [vmem:[%s221 + $0x35] sm:$0xff]
        %s900 = scalar_lea.vmem %s1, 40
        %v901 = vld [vmem:[%s900] sm:$0xff]
        %v903 = vsel %vm239, %v893, 0
        %v906 = vsel %vm239, %v894, 0
        %v909 = vsel %vm239, %v895, 0
        %v912 = vsel %vm239, %v896, 0
        %v915 = vsel %vm239, %v897, 0
        %v918 = vsel %vm239, %v898, 0
        %v921 = vsel %vm239, %v899, 0
        %923 = vmatprep.subr.mxu0 0.0
        %924 = vmatpush1.msra.mxu0 %v901
        %925 = vmatprep.subr.mxu0 0.0
        %926 = vmatpush1.msra.mxu0 0.0
        %927 = vmatprep.subr.mxu0 0.0
        %928 = vmatpush1.msra.mxu0 0.0
        %929 = vmatprep.subr.mxu0 0.0
        %930 = vmatpush1.msra.mxu0 0.0
        %931 = vmatprep.subr.mxu0 0.0
        %932 = vmatpush1.msra.mxu0 0.0
        %933 = vmatprep.subr.mxu0 0.0
        %934 = vmatpush1.msra.mxu0 0.0
        %935 = vmatprep.subr.mxu0 0.0
        %936 = vmatpush1.msra.mxu0 0.0
        %937 = vmatprep.subr.mxu0 0.0
        %938 = vmatpush1.msra.mxu0 0.0
        %939 = vmatprep.subr.mxu0 0.0
        %940 = vmatpush1.msra.mxu0 0.0
        %941 = vmatprep.subr.mxu0 0.0
        %942 = vmatpush1.msra.mxu0 0.0
        %943 = vmatprep.subr.mxu0 0.0
        %944 = vmatpush1.msra.mxu0 0.0
        %945 = vmatprep.subr.mxu0 0.0
        %946 = vmatpush1.msra.mxu0 0.0
        %947 = vmatprep.subr.mxu0 0.0
        %948 = vmatpush1.msra.mxu0 0.0
        %949 = vmatprep.subr.mxu0 0.0
        %950 = vmatpush1.msra.mxu0 0.0
        %951 = vmatprep.subr.mxu0 0.0
        %952 = vmatpush1.msra.mxu0 0.0
        %953 = vmatprep.subr.mxu0 0.0
        %954 = vmatpush1.msra.mxu0 0.0
        %955 = vmatprep.subr.mxu0 0.0
        %956 = vmatpush1.msra.mxu0 0.0
        %957 = vmatprep.subr.mxu0 0.0
        %958 = vmatpush1.msra.mxu0 0.0
        %959 = vmatprep.subr.mxu0 0.0
        %960 = vmatpush1.msra.mxu0 0.0
        %961 = vmatprep.subr.mxu0 0.0
        %962 = vmatpush1.msra.mxu0 0.0
        %963 = vmatprep.subr.mxu0 0.0
        %964 = vmatpush1.msra.mxu0 0.0
        %965 = vmatprep.subr.mxu0 0.0
        %966 = vmatpush1.msra.mxu0 0.0
        %967 = vmatprep.subr.mxu0 0.0
        %968 = vmatpush1.msra.mxu0 0.0
        %969 = vmatprep.subr.mxu0 0.0
        %970 = vmatpush1.msra.mxu0 0.0
        %971 = vmatprep.subr.mxu0 0.0
        %972 = vmatpush1.msra.mxu0 0.0
        %973 = vmatprep.subr.mxu0 0.0
        %974 = vmatpush1.msra.mxu0 0.0
        %975 = vmatprep.subr.mxu0 0.0
        %976 = vmatpush1.msra.mxu0 0.0
        %977 = vmatprep.subr.mxu0 0.0
        %978 = vmatpush1.msra.mxu0 0.0
        %979 = vmatprep.subr.mxu0 0.0
        %980 = vmatpush1.msra.mxu0 0.0
        %981 = vmatprep.subr.mxu0 0.0
        %982 = vmatpush1.msra.mxu0 0.0
        %983 = vmatprep.subr.mxu0 0.0
        %984 = vmatpush1.msra.mxu0 0.0
        %985 = vmatprep.subr.mxu0 0.0
        %986 = vmatpush1.msra.mxu0 0.0
        %987 = vmatprep.mubr.f32.mxu0 0.0
        %988 = vmatmul.mubr.f32.gmra.mrb[0].mxu0 %v903
        %v989 = vpop.f32.mrb[0].mxu0
        %v990 = vadd.f32 0.0, %v989
        %v991 = vpop.f32.mrb[0].mxu0
        %992 = vmatprep.mubr.f32.mxu0 0.0
        %993 = vmatmul.mubr.f32.gmra.mrb[0].mxu0 %v906
        %v994 = vpop.f32.mrb[0].mxu0
        %v995 = vadd.f32 0.0, %v994
        %v996 = vpop.f32.mrb[0].mxu0
        %997 = vmatprep.mubr.f32.mxu0 0.0
        %998 = vmatmul.mubr.f32.gmra.mrb[0].mxu0 %v909
        %v999 = vpop.f32.mrb[0].mxu0
        %v1000 = vadd.f32 0.0, %v999
        %v1001 = vpop.f32.mrb[0].mxu0
        %1002 = vmatprep.mubr.f32.mxu0 0.0
        %1003 = vmatmul.mubr.f32.gmra.mrb[0].mxu0 %v912
        %v1004 = vpop.f32.mrb[0].mxu0
        %v1005 = vadd.f32 0.0, %v1004
        %v1006 = vpop.f32.mrb[0].mxu0
        %1007 = vmatprep.mubr.f32.mxu0 0.0
        %1008 = vmatmul.mubr.f32.gmra.mrb[0].mxu0 %v915
        %v1009 = vpop.f32.mrb[0].mxu0
        %v1010 = vadd.f32 0.0, %v1009
        %v1011 = vpop.f32.mrb[0].mxu0
        %1012 = vmatprep.mubr.f32.mxu0 0.0
        %1013 = vmatmul.mubr.f32.gmra.mrb[0].mxu0 %v918
        %v1014 = vpop.f32.mrb[0].mxu0
        %v1015 = vadd.f32 0.0, %v1014
        %v1016 = vpop.f32.mrb[0].mxu0
        %1017 = vmatprep.mubr.f32.mxu0 0.0
        %1018 = vmatmul.mubr.f32.gmra.mrb[0].mxu0 %v921
        %v1019 = vpop.f32.mrb[0].mxu0
        %v1020 = vadd.f32 0.0, %v1019
        %v1021 = vpop.f32.mrb[0].mxu0
        %1022 = vdwg.mxu0
        %v1023 = vadd.f32 %v886, %v990
        %v1024 = vadd.f32 %v887, %v995
        %v1025 = vadd.f32 %v888, %v1000
        %v1026 = vadd.f32 %v889, %v1005
        %v1027 = vadd.f32 %v890, %v1010
        %v1028 = vadd.f32 %v891, %v1015
        %v1029 = vadd.f32 %v892, %v1020
        %v1030 = vld [vmem:[%s221 + $0x6] sm:$0xff]
        %v1031 = vld [vmem:[%s221 + $0xe] sm:$0xff]
        %v1032 = vld [vmem:[%s221 + $0x16] sm:$0xff]
        %v1033 = vld [vmem:[%s221 + $0x1e] sm:$0xff]
        %v1034 = vld [vmem:[%s221 + $0x26] sm:$0xff]
        %v1035 = vld [vmem:[%s221 + $0x2e] sm:$0xff]
        %v1036 = vld [vmem:[%s221 + $0x36] sm:$0xff]
        %s1037 = scalar_lea.vmem %s1, 48
        %v1038 = vld [vmem:[%s1037] sm:$0xff]
        %v1040 = vsel %vm239, %v1030, 0
        %v1043 = vsel %vm239, %v1031, 0
        %v1046 = vsel %vm239, %v1032, 0
        %v1049 = vsel %vm239, %v1033, 0
        %v1052 = vsel %vm239, %v1034, 0
        %v1055 = vsel %vm239, %v1035, 0
        %v1058 = vsel %vm239, %v1036, 0
        %1060 = vmatprep.subr.mxu0 0.0
        %1061 = vmatpush1.msra.mxu0 %v1038
        %1062 = vmatprep.subr.mxu0 0.0
        %1063 = vmatpush1.msra.mxu0 0.0
        %1064 = vmatprep.subr.mxu0 0.0
        %1065 = vmatpush1.msra.mxu0 0.0
        %1066 = vmatprep.subr.mxu0 0.0
        %1067 = vmatpush1.msra.mxu0 0.0
        %1068 = vmatprep.subr.mxu0 0.0
        %1069 = vmatpush1.msra.mxu0 0.0
        %1070 = vmatprep.subr.mxu0 0.0
        %1071 = vmatpush1.msra.mxu0 0.0
        %1072 = vmatprep.subr.mxu0 0.0
        %1073 = vmatpush1.msra.mxu0 0.0
        %1074 = vmatprep.subr.mxu0 0.0
        %1075 = vmatpush1.msra.mxu0 0.0
        %1076 = vmatprep.subr.mxu0 0.0
        %1077 = vmatpush1.msra.mxu0 0.0
        %1078 = vmatprep.subr.mxu0 0.0
        %1079 = vmatpush1.msra.mxu0 0.0
        %1080 = vmatprep.subr.mxu0 0.0
        %1081 = vmatpush1.msra.mxu0 0.0
        %1082 = vmatprep.subr.mxu0 0.0
        %1083 = vmatpush1.msra.mxu0 0.0
        %1084 = vmatprep.subr.mxu0 0.0
        %1085 = vmatpush1.msra.mxu0 0.0
        %1086 = vmatprep.subr.mxu0 0.0
        %1087 = vmatpush1.msra.mxu0 0.0
        %1088 = vmatprep.subr.mxu0 0.0
        %1089 = vmatpush1.msra.mxu0 0.0
        %1090 = vmatprep.subr.mxu0 0.0
        %1091 = vmatpush1.msra.mxu0 0.0
        %1092 = vmatprep.subr.mxu0 0.0
        %1093 = vmatpush1.msra.mxu0 0.0
        %1094 = vmatprep.subr.mxu0 0.0
        %1095 = vmatpush1.msra.mxu0 0.0
        %1096 = vmatprep.subr.mxu0 0.0
        %1097 = vmatpush1.msra.mxu0 0.0
        %1098 = vmatprep.subr.mxu0 0.0
        %1099 = vmatpush1.msra.mxu0 0.0
        %1100 = vmatprep.subr.mxu0 0.0
        %1101 = vmatpush1.msra.mxu0 0.0
        %1102 = vmatprep.subr.mxu0 0.0
        %1103 = vmatpush1.msra.mxu0 0.0
        %1104 = vmatprep.subr.mxu0 0.0
        %1105 = vmatpush1.msra.mxu0 0.0
        %1106 = vmatprep.subr.mxu0 0.0
        %1107 = vmatpush1.msra.mxu0 0.0
        %1108 = vmatprep.subr.mxu0 0.0
        %1109 = vmatpush1.msra.mxu0 0.0
        %1110 = vmatprep.subr.mxu0 0.0
        %1111 = vmatpush1.msra.mxu0 0.0
        %1112 = vmatprep.subr.mxu0 0.0
        %1113 = vmatpush1.msra.mxu0 0.0
        %1114 = vmatprep.subr.mxu0 0.0
        %1115 = vmatpush1.msra.mxu0 0.0
        %1116 = vmatprep.subr.mxu0 0.0
        %1117 = vmatpush1.msra.mxu0 0.0
        %1118 = vmatprep.subr.mxu0 0.0
        %1119 = vmatpush1.msra.mxu0 0.0
        %1120 = vmatprep.subr.mxu0 0.0
        %1121 = vmatpush1.msra.mxu0 0.0
        %1122 = vmatprep.subr.mxu0 0.0
        %1123 = vmatpush1.msra.mxu0 0.0
        %1124 = vmatprep.mubr.f32.mxu0 0.0
        %1125 = vmatmul.mubr.f32.gmra.mrb[0].mxu0 %v1040
        %v1126 = vpop.f32.mrb[0].mxu0
        %v1127 = vadd.f32 0.0, %v1126
        %v1128 = vpop.f32.mrb[0].mxu0
        %1129 = vmatprep.mubr.f32.mxu0 0.0
        %1130 = vmatmul.mubr.f32.gmra.mrb[0].mxu0 %v1043
        %v1131 = vpop.f32.mrb[0].mxu0
        %v1132 = vadd.f32 0.0, %v1131
        %v1133 = vpop.f32.mrb[0].mxu0
        %1134 = vmatprep.mubr.f32.mxu0 0.0
        %1135 = vmatmul.mubr.f32.gmra.mrb[0].mxu0 %v1046
        %v1136 = vpop.f32.mrb[0].mxu0
        %v1137 = vadd.f32 0.0, %v1136
        %v1138 = vpop.f32.mrb[0].mxu0
        %1139 = vmatprep.mubr.f32.mxu0 0.0
        %1140 = vmatmul.mubr.f32.gmra.mrb[0].mxu0 %v1049
        %v1141 = vpop.f32.mrb[0].mxu0
        %v1142 = vadd.f32 0.0, %v1141
        %v1143 = vpop.f32.mrb[0].mxu0
        %1144 = vmatprep.mubr.f32.mxu0 0.0
        %1145 = vmatmul.mubr.f32.gmra.mrb[0].mxu0 %v1052
        %v1146 = vpop.f32.mrb[0].mxu0
        %v1147 = vadd.f32 0.0, %v1146
        %v1148 = vpop.f32.mrb[0].mxu0
        %1149 = vmatprep.mubr.f32.mxu0 0.0
        %1150 = vmatmul.mubr.f32.gmra.mrb[0].mxu0 %v1055
        %v1151 = vpop.f32.mrb[0].mxu0
        %v1152 = vadd.f32 0.0, %v1151
        %v1153 = vpop.f32.mrb[0].mxu0
        %1154 = vmatprep.mubr.f32.mxu0 0.0
        %1155 = vmatmul.mubr.f32.gmra.mrb[0].mxu0 %v1058
        %v1156 = vpop.f32.mrb[0].mxu0
        %v1157 = vadd.f32 0.0, %v1156
        %v1158 = vpop.f32.mrb[0].mxu0
        %1159 = vdwg.mxu0
        %v1160 = vadd.f32 %v1023, %v1127
        %v1161 = vadd.f32 %v1024, %v1132
        %v1162 = vadd.f32 %v1025, %v1137
        %v1163 = vadd.f32 %v1026, %v1142
        %v1164 = vadd.f32 %v1027, %v1147
        %v1165 = vadd.f32 %v1028, %v1152
        %v1166 = vadd.f32 %v1029, %v1157
        %v1167 = vld [vmem:[%s221 + $0x7] sm:$0xff]
        %v1168 = vld [vmem:[%s221 + $0xf] sm:$0xff]
        %v1169 = vld [vmem:[%s221 + $0x17] sm:$0xff]
        %v1170 = vld [vmem:[%s221 + $0x1f] sm:$0xff]
        %v1171 = vld [vmem:[%s221 + $0x27] sm:$0xff]
        %v1172 = vld [vmem:[%s221 + $0x2f] sm:$0xff]
        %v1173 = vld [vmem:[%s221 + $0x37] sm:$0xff]
        %s1174 = scalar_lea.vmem %s1, 56
        %v1175 = vld [vmem:[%s1174] sm:$0xff]
        %v1177 = vsel %vm239, %v1167, 0
        %v1180 = vsel %vm239, %v1168, 0
        %v1183 = vsel %vm239, %v1169, 0
        %v1186 = vsel %vm239, %v1170, 0
        %v1189 = vsel %vm239, %v1171, 0
        %v1192 = vsel %vm239, %v1172, 0
        %v1195 = vsel %vm239, %v1173, 0
        %1197 = vmatprep.subr.mxu0 0.0
        %1198 = vmatpush1.msra.mxu0 %v1175
        %1199 = vmatprep.subr.mxu0 0.0
        %1200 = vmatpush1.msra.mxu0 0.0
        %1201 = vmatprep.subr.mxu0 0.0
        %1202 = vmatpush1.msra.mxu0 0.0
        %1203 = vmatprep.subr.mxu0 0.0
        %1204 = vmatpush1.msra.mxu0 0.0
        %1205 = vmatprep.subr.mxu0 0.0
        %1206 = vmatpush1.msra.mxu0 0.0
        %1207 = vmatprep.subr.mxu0 0.0
        %1208 = vmatpush1.msra.mxu0 0.0
        %1209 = vmatprep.subr.mxu0 0.0
        %1210 = vmatpush1.msra.mxu0 0.0
        %1211 = vmatprep.subr.mxu0 0.0
        %1212 = vmatpush1.msra.mxu0 0.0
        %1213 = vmatprep.subr.mxu0 0.0
        %1214 = vmatpush1.msra.mxu0 0.0
        %1215 = vmatprep.subr.mxu0 0.0
        %1216 = vmatpush1.msra.mxu0 0.0
        %1217 = vmatprep.subr.mxu0 0.0
        %1218 = vmatpush1.msra.mxu0 0.0
        %1219 = vmatprep.subr.mxu0 0.0
        %1220 = vmatpush1.msra.mxu0 0.0
        %1221 = vmatprep.subr.mxu0 0.0
        %1222 = vmatpush1.msra.mxu0 0.0
        %1223 = vmatprep.subr.mxu0 0.0
        %1224 = vmatpush1.msra.mxu0 0.0
        %1225 = vmatprep.subr.mxu0 0.0
        %1226 = vmatpush1.msra.mxu0 0.0
        %1227 = vmatprep.subr.mxu0 0.0
        %1228 = vmatpush1.msra.mxu0 0.0
        %1229 = vmatprep.subr.mxu0 0.0
        %1230 = vmatpush1.msra.mxu0 0.0
        %1231 = vmatprep.subr.mxu0 0.0
        %1232 = vmatpush1.msra.mxu0 0.0
        %1233 = vmatprep.subr.mxu0 0.0
        %1234 = vmatpush1.msra.mxu0 0.0
        %1235 = vmatprep.subr.mxu0 0.0
        %1236 = vmatpush1.msra.mxu0 0.0
        %1237 = vmatprep.subr.mxu0 0.0
        %1238 = vmatpush1.msra.mxu0 0.0
        %1239 = vmatprep.subr.mxu0 0.0
        %1240 = vmatpush1.msra.mxu0 0.0
        %1241 = vmatprep.subr.mxu0 0.0
        %1242 = vmatpush1.msra.mxu0 0.0
        %1243 = vmatprep.subr.mxu0 0.0
        %1244 = vmatpush1.msra.mxu0 0.0
        %1245 = vmatprep.subr.mxu0 0.0
        %1246 = vmatpush1.msra.mxu0 0.0
        %1247 = vmatprep.subr.mxu0 0.0
        %1248 = vmatpush1.msra.mxu0 0.0
        %1249 = vmatprep.subr.mxu0 0.0
        %1250 = vmatpush1.msra.mxu0 0.0
        %1251 = vmatprep.subr.mxu0 0.0
        %1252 = vmatpush1.msra.mxu0 0.0
        %1253 = vmatprep.subr.mxu0 0.0
        %1254 = vmatpush1.msra.mxu0 0.0
        %1255 = vmatprep.subr.mxu0 0.0
        %1256 = vmatpush1.msra.mxu0 0.0
        %1257 = vmatprep.subr.mxu0 0.0
        %1258 = vmatpush1.msra.mxu0 0.0
        %1259 = vmatprep.subr.mxu0 0.0
        %1260 = vmatpush1.msra.mxu0 0.0
        %1261 = vmatprep.mubr.f32.mxu0 0.0
        %1262 = vmatmul.mubr.f32.gmra.mrb[0].mxu0 %v1177
        %v1263 = vpop.f32.mrb[0].mxu0
        %v1264 = vadd.f32 0.0, %v1263
        %v1265 = vpop.f32.mrb[0].mxu0
        %1266 = vmatprep.mubr.f32.mxu0 0.0
        %1267 = vmatmul.mubr.f32.gmra.mrb[0].mxu0 %v1180
        %v1268 = vpop.f32.mrb[0].mxu0
        %v1269 = vadd.f32 0.0, %v1268
        %v1270 = vpop.f32.mrb[0].mxu0
        %1271 = vmatprep.mubr.f32.mxu0 0.0
        %1272 = vmatmul.mubr.f32.gmra.mrb[0].mxu0 %v1183
        %v1273 = vpop.f32.mrb[0].mxu0
        %v1274 = vadd.f32 0.0, %v1273
        %v1275 = vpop.f32.mrb[0].mxu0
        %1276 = vmatprep.mubr.f32.mxu0 0.0
        %1277 = vmatmul.mubr.f32.gmra.mrb[0].mxu0 %v1186
        %v1278 = vpop.f32.mrb[0].mxu0
        %v1279 = vadd.f32 0.0, %v1278
        %v1280 = vpop.f32.mrb[0].mxu0
        %1281 = vmatprep.mubr.f32.mxu0 0.0
        %1282 = vmatmul.mubr.f32.gmra.mrb[0].mxu0 %v1189
        %v1283 = vpop.f32.mrb[0].mxu0
        %v1284 = vadd.f32 0.0, %v1283
        %v1285 = vpop.f32.mrb[0].mxu0
        %1286 = vmatprep.mubr.f32.mxu0 0.0
        %1287 = vmatmul.mubr.f32.gmra.mrb[0].mxu0 %v1192
        %v1288 = vpop.f32.mrb[0].mxu0
        %v1289 = vadd.f32 0.0, %v1288
        %v1290 = vpop.f32.mrb[0].mxu0
        %1291 = vmatprep.mubr.f32.mxu0 0.0
        %1292 = vmatmul.mubr.f32.gmra.mrb[0].mxu0 %v1195
        %v1293 = vpop.f32.mrb[0].mxu0
        %v1294 = vadd.f32 0.0, %v1293
        %v1295 = vpop.f32.mrb[0].mxu0
        %1296 = vdwg.mxu0
        %v1297 = vadd.f32 %v1160, %v1264
        %v1298 = vadd.f32 %v1161, %v1269
        %v1299 = vadd.f32 %v1162, %v1274
        %v1300 = vadd.f32 %v1163, %v1279
        %v1301 = vadd.f32 %v1164, %v1284
        %v1302 = vadd.f32 %v1165, %v1289
        %v1303 = vadd.f32 %v1166, %v1294
        %v1304 = vld [vmem:[%s2] sm:$0x1]
        %v1306 = vlaneseq
        %v1307 = vshrl.u32 %v1306, 7
        %v1308 = vsub.s32 0, %v1307
        %v1309 = vrot.slane %v1304, %v1308
        %v1311 = vadd.f32 %v1297, %v1309
        %v1312 = vadd.f32 %v1298, %v1309
        %v1313 = vadd.f32 %v1299, %v1309
        %v1314 = vadd.f32 %v1300, %v1309
        %v1315 = vadd.f32 %v1301, %v1309
        %v1316 = vadd.f32 %v1302, %v1309
        %v1317 = vadd.f32 %v1303, %v1309
        %v1318 = vmax.f32 %v1311, 0.0
        %v1319 = vmax.f32 %v1312, 0.0
        %v1320 = vmax.f32 %v1313, 0.0
        %v1321 = vmax.f32 %v1314, 0.0
        %v1322 = vmax.f32 %v1315, 0.0
        %v1323 = vmax.f32 %v1316, 0.0
        %v1324 = vmax.f32 %v1317, 0.0
        %vm1332 = vcmask 1046528
        %v1333 = vrot.slane %v1318, 1
        %v1334 = vrot.slane %v1319, 1
        %v1335 = vsel %vm1332, %v1333, %v1334
        %v1336 = vrot.slane %v1320, 1
        %v1337 = vsel %vm1332, %v1334, %v1336
        %v1338 = vrot.slane %v1321, 1
        %v1339 = vsel %vm1332, %v1336, %v1338
        %v1340 = vrot.slane %v1322, 1
        %v1341 = vsel %vm1332, %v1338, %v1340
        %v1342 = vrot.slane %v1323, 1
        %v1343 = vsel %vm1332, %v1340, %v1342
        %v1344 = vrot.slane %v1324, 1
        %v1345 = vsel %vm1332, %v1342, %v1344
        %v1353 = vmax.f32 %v1318, %v1335
        %v1354 = vmax.f32 %v1319, %v1337
        %v1355 = vmax.f32 %v1320, %v1339
        %v1356 = vmax.f32 %v1321, %v1341
        %v1357 = vmax.f32 %v1322, %v1343
        %v1358 = vmax.f32 %v1323, %v1345
        %v1359 = vmax.f32 %v1324, %v1344
        %vm1360 = vcmask 1045504
        %v1361 = vrot.slane %v1318, 2
        %v1362 = vrot.slane %v1319, 2
        %v1363 = vsel %vm1360, %v1361, %v1362
        %v1364 = vrot.slane %v1320, 2
        %v1365 = vsel %vm1360, %v1362, %v1364
        %v1366 = vrot.slane %v1321, 2
        %v1367 = vsel %vm1360, %v1364, %v1366
        %v1368 = vrot.slane %v1322, 2
        %v1369 = vsel %vm1360, %v1366, %v1368
        %v1370 = vrot.slane %v1323, 2
        %v1371 = vsel %vm1360, %v1368, %v1370
        %v1372 = vrot.slane %v1324, 2
        %v1373 = vsel %vm1360, %v1370, %v1372
        %v1381 = vmax.f32 %v1353, %v1363
        %v1382 = vmax.f32 %v1354, %v1365
        %v1383 = vmax.f32 %v1355, %v1367
        %v1384 = vmax.f32 %v1356, %v1369
        %v1385 = vmax.f32 %v1357, %v1371
        %v1386 = vmax.f32 %v1358, %v1373
        %v1387 = vmax.f32 %v1359, %v1372
        %vm1388 = vcmask 1044480
        %v1389 = vrot.slane %v1318, 3
        %v1390 = vrot.slane %v1319, 3
        %v1391 = vsel %vm1388, %v1389, %v1390
        %v1392 = vrot.slane %v1320, 3
        %v1393 = vsel %vm1388, %v1390, %v1392
        %v1394 = vrot.slane %v1321, 3
        %v1395 = vsel %vm1388, %v1392, %v1394
        %v1396 = vrot.slane %v1322, 3
        %v1397 = vsel %vm1388, %v1394, %v1396
        %v1398 = vrot.slane %v1323, 3
        %v1399 = vsel %vm1388, %v1396, %v1398
        %v1400 = vrot.slane %v1324, 3
        %v1401 = vsel %vm1388, %v1398, %v1400
        %v1409 = vmax.f32 %v1381, %v1391
        %v1410 = vmax.f32 %v1382, %v1393
        %v1411 = vmax.f32 %v1383, %v1395
        %v1412 = vmax.f32 %v1384, %v1397
        %v1413 = vmax.f32 %v1385, %v1399
        %v1414 = vmax.f32 %v1386, %v1401
        %v1415 = vmax.f32 %v1387, %v1400
        %v1416 = vld [vmem:[%s4] sm:$0x1]
        %v1417 = vld [vmem:[%s3] sm:$0xff]
        %v1418 = vld [vmem:[%s3 + $0x8] sm:$0xff]
        %v1419 = vld [vmem:[%s3 + $0x10] sm:$0xff]
        %v1420 = vld [vmem:[%s3 + $0x18] sm:$0xff]
        %v1421 = vld [vmem:[%s3 + $0x20] sm:$0xff]
        %v1422 = vld [vmem:[%s3 + $0x28] sm:$0xff]
        %v1423 = vld [vmem:[%s3 + $0x30] sm:$0xff]
        %v1424 = vld [vmem:[%s3 + $0x38] sm:$0xff]
        %v1425 = vld [vmem:[%s3 + $0x40] sm:$0xff]
        %v1426 = vld [vmem:[%s3 + $0x48] sm:$0xff]
        %v1427 = vld [vmem:[%s3 + $0x50] sm:$0xff]
        %v1428 = vld [vmem:[%s3 + $0x58] sm:$0xff]
        %v1429 = vld [vmem:[%s3 + $0x60] sm:$0xff]
        %v1430 = vld [vmem:[%s3 + $0x68] sm:$0xff]
        %v1431 = vld [vmem:[%s3 + $0x70] sm:$0xff]
        %v1432 = vld [vmem:[%s3 + $0x78] sm:$0xff]
        %1433 = vmatprep.subr.mxu0 0.0
        %1434 = vmatpush1.msra.mxu0 %v1417
        %1435 = vmatprep.subr.mxu0 0.0
        %1436 = vmatpush1.msra.mxu0 %v1418
        %1437 = vmatprep.subr.mxu0 0.0
        %1438 = vmatpush1.msra.mxu0 %v1419
        %1439 = vmatprep.subr.mxu0 0.0
        %1440 = vmatpush1.msra.mxu0 %v1420
        %1441 = vmatprep.subr.mxu0 0.0
        %1442 = vmatpush1.msra.mxu0 %v1421
        %1443 = vmatprep.subr.mxu0 0.0
        %1444 = vmatpush1.msra.mxu0 %v1422
        %1445 = vmatprep.subr.mxu0 0.0
        %1446 = vmatpush1.msra.mxu0 %v1423
        %1447 = vmatprep.subr.mxu0 0.0
        %1448 = vmatpush1.msra.mxu0 %v1424
        %1449 = vmatprep.subr.mxu0 0.0
        %1450 = vmatpush1.msra.mxu0 %v1425
        %1451 = vmatprep.subr.mxu0 0.0
        %1452 = vmatpush1.msra.mxu0 %v1426
        %1453 = vmatprep.subr.mxu0 0.0
        %1454 = vmatpush1.msra.mxu0 %v1427
        %1455 = vmatprep.subr.mxu0 0.0
        %1456 = vmatpush1.msra.mxu0 %v1428
        %1457 = vmatprep.subr.mxu0 0.0
        %1458 = vmatpush1.msra.mxu0 %v1429
        %1459 = vmatprep.subr.mxu0 0.0
        %1460 = vmatpush1.msra.mxu0 %v1430
        %1461 = vmatprep.subr.mxu0 0.0
        %1462 = vmatpush1.msra.mxu0 %v1431
        %1463 = vmatprep.subr.mxu0 0.0
        %1464 = vmatpush1.msra.mxu0 %v1432
        %1465 = vmatprep.subr.mxu0 0.0
        %1466 = vmatpush1.msra.mxu0 0.0
        %1467 = vmatprep.subr.mxu0 0.0
        %1468 = vmatpush1.msra.mxu0 0.0
        %1469 = vmatprep.subr.mxu0 0.0
        %1470 = vmatpush1.msra.mxu0 0.0
        %1471 = vmatprep.subr.mxu0 0.0
        %1472 = vmatpush1.msra.mxu0 0.0
        %1473 = vmatprep.subr.mxu0 0.0
        %1474 = vmatpush1.msra.mxu0 0.0
        %1475 = vmatprep.subr.mxu0 0.0
        %1476 = vmatpush1.msra.mxu0 0.0
        %1477 = vmatprep.subr.mxu0 0.0
        %1478 = vmatpush1.msra.mxu0 0.0
        %1479 = vmatprep.subr.mxu0 0.0
        %1480 = vmatpush1.msra.mxu0 0.0
        %1481 = vmatprep.subr.mxu0 0.0
        %1482 = vmatpush1.msra.mxu0 0.0
        %1483 = vmatprep.subr.mxu0 0.0
        %1484 = vmatpush1.msra.mxu0 0.0
        %1485 = vmatprep.subr.mxu0 0.0
        %1486 = vmatpush1.msra.mxu0 0.0
        %1487 = vmatprep.subr.mxu0 0.0
        %1488 = vmatpush1.msra.mxu0 0.0
        %1489 = vmatprep.subr.mxu0 0.0
        %1490 = vmatpush1.msra.mxu0 0.0
        %1491 = vmatprep.subr.mxu0 0.0
        %1492 = vmatpush1.msra.mxu0 0.0
        %1493 = vmatprep.subr.mxu0 0.0
        %1494 = vmatpush1.msra.mxu0 0.0
        %1495 = vmatprep.subr.mxu0 0.0
        %1496 = vmatpush1.msra.mxu0 0.0
        %1497 = vmatprep.mubr.f32.mxu0 0.0
        %1498 = vmatmul.mubr.f32.gmra.mrb[0].mxu0 %v1409
        %v1499 = vpop.f32.mrb[0].mxu0
        %v1500 = vadd.f32 0.0, %v1499
        %v1501 = vpop.f32.mrb[0].mxu0
        %1502 = vdwg.mxu0
        %v1503 = vadd.f32 %v1416, %v1500
        %s1504 = scalar_lea.vmem %s3, 128
        %v1505 = vld [vmem:[%s1504] sm:$0xff]
        %v1506 = vld [vmem:[%s1504 + $0x8] sm:$0xff]
        %v1507 = vld [vmem:[%s1504 + $0x10] sm:$0xff]
        %v1508 = vld [vmem:[%s1504 + $0x18] sm:$0xff]
        %v1509 = vld [vmem:[%s1504 + $0x20] sm:$0xff]
        %v1510 = vld [vmem:[%s1504 + $0x28] sm:$0xff]
        %v1511 = vld [vmem:[%s1504 + $0x30] sm:$0xff]
        %v1512 = vld [vmem:[%s1504 + $0x38] sm:$0xff]
        %v1513 = vld [vmem:[%s1504 + $0x40] sm:$0xff]
        %v1514 = vld [vmem:[%s1504 + $0x48] sm:$0xff]
        %v1515 = vld [vmem:[%s1504 + $0x50] sm:$0xff]
        %v1516 = vld [vmem:[%s1504 + $0x58] sm:$0xff]
        %v1517 = vld [vmem:[%s1504 + $0x60] sm:$0xff]
        %v1518 = vld [vmem:[%s1504 + $0x68] sm:$0xff]
        %v1519 = vld [vmem:[%s1504 + $0x70] sm:$0xff]
        %v1520 = vld [vmem:[%s1504 + $0x78] sm:$0xff]
        %v1522 = vrot.slane %v1409, 4
        %1524 = vmatprep.subr.mxu0 0.0
        %1525 = vmatpush1.msra.mxu0 %v1505
        %1526 = vmatprep.subr.mxu0 0.0
        %1527 = vmatpush1.msra.mxu0 %v1506
        %1528 = vmatprep.subr.mxu0 0.0
        %1529 = vmatpush1.msra.mxu0 %v1507
        %1530 = vmatprep.subr.mxu0 0.0
        %1531 = vmatpush1.msra.mxu0 %v1508
        %1532 = vmatprep.subr.mxu0 0.0
        %1533 = vmatpush1.msra.mxu0 %v1509
        %1534 = vmatprep.subr.mxu0 0.0
        %1535 = vmatpush1.msra.mxu0 %v1510
        %1536 = vmatprep.subr.mxu0 0.0
        %1537 = vmatpush1.msra.mxu0 %v1511
        %1538 = vmatprep.subr.mxu0 0.0
        %1539 = vmatpush1.msra.mxu0 %v1512
        %1540 = vmatprep.subr.mxu0 0.0
        %1541 = vmatpush1.msra.mxu0 %v1513
        %1542 = vmatprep.subr.mxu0 0.0
        %1543 = vmatpush1.msra.mxu0 %v1514
        %1544 = vmatprep.subr.mxu0 0.0
        %1545 = vmatpush1.msra.mxu0 %v1515
        %1546 = vmatprep.subr.mxu0 0.0
        %1547 = vmatpush1.msra.mxu0 %v1516
        %1548 = vmatprep.subr.mxu0 0.0
        %1549 = vmatpush1.msra.mxu0 %v1517
        %1550 = vmatprep.subr.mxu0 0.0
        %1551 = vmatpush1.msra.mxu0 %v1518
        %1552 = vmatprep.subr.mxu0 0.0
        %1553 = vmatpush1.msra.mxu0 %v1519
        %1554 = vmatprep.subr.mxu0 0.0
        %1555 = vmatpush1.msra.mxu0 %v1520
        %1556 = vmatprep.subr.mxu0 0.0
        %1557 = vmatpush1.msra.mxu0 0.0
        %1558 = vmatprep.subr.mxu0 0.0
        %1559 = vmatpush1.msra.mxu0 0.0
        %1560 = vmatprep.subr.mxu0 0.0
        %1561 = vmatpush1.msra.mxu0 0.0
        %1562 = vmatprep.subr.mxu0 0.0
        %1563 = vmatpush1.msra.mxu0 0.0
        %1564 = vmatprep.subr.mxu0 0.0
        %1565 = vmatpush1.msra.mxu0 0.0
        %1566 = vmatprep.subr.mxu0 0.0
        %1567 = vmatpush1.msra.mxu0 0.0
        %1568 = vmatprep.subr.mxu0 0.0
        %1569 = vmatpush1.msra.mxu0 0.0
        %1570 = vmatprep.subr.mxu0 0.0
        %1571 = vmatpush1.msra.mxu0 0.0
        %1572 = vmatprep.subr.mxu0 0.0
        %1573 = vmatpush1.msra.mxu0 0.0
        %1574 = vmatprep.subr.mxu0 0.0
        %1575 = vmatpush1.msra.mxu0 0.0
        %1576 = vmatprep.subr.mxu0 0.0
        %1577 = vmatpush1.msra.mxu0 0.0
        %1578 = vmatprep.subr.mxu0 0.0
        %1579 = vmatpush1.msra.mxu0 0.0
        %1580 = vmatprep.subr.mxu0 0.0
        %1581 = vmatpush1.msra.mxu0 0.0
        %1582 = vmatprep.subr.mxu0 0.0
        %1583 = vmatpush1.msra.mxu0 0.0
        %1584 = vmatprep.subr.mxu0 0.0
        %1585 = vmatpush1.msra.mxu0 0.0
        %1586 = vmatprep.subr.mxu0 0.0
        %1587 = vmatpush1.msra.mxu0 0.0
        %1588 = vmatprep.mubr.f32.mxu0 0.0
        %1589 = vmatmul.mubr.f32.gmra.mrb[0].mxu0 %v1522
        %v1590 = vpop.f32.mrb[0].mxu0
        %v1591 = vadd.f32 0.0, %v1590
        %v1592 = vpop.f32.mrb[0].mxu0
        %1593 = vdwg.mxu0
        %v1594 = vadd.f32 %v1503, %v1591
        %s1595 = scalar_lea.vmem %s3, 256
        %v1596 = vld [vmem:[%s1595] sm:$0xff]
        %v1597 = vld [vmem:[%s1595 + $0x8] sm:$0xff]
        %v1598 = vld [vmem:[%s1595 + $0x10] sm:$0xff]
        %v1599 = vld [vmem:[%s1595 + $0x18] sm:$0xff]
        %v1600 = vld [vmem:[%s1595 + $0x20] sm:$0xff]
        %v1601 = vld [vmem:[%s1595 + $0x28] sm:$0xff]
        %v1602 = vld [vmem:[%s1595 + $0x30] sm:$0xff]
        %v1603 = vld [vmem:[%s1595 + $0x38] sm:$0xff]
        %v1604 = vld [vmem:[%s1595 + $0x40] sm:$0xff]
        %v1605 = vld [vmem:[%s1595 + $0x48] sm:$0xff]
        %v1606 = vld [vmem:[%s1595 + $0x50] sm:$0xff]
        %v1607 = vld [vmem:[%s1595 + $0x58] sm:$0xff]
        %v1608 = vld [vmem:[%s1595 + $0x60] sm:$0xff]
        %v1609 = vld [vmem:[%s1595 + $0x68] sm:$0xff]
        %v1610 = vld [vmem:[%s1595 + $0x70] sm:$0xff]
        %v1611 = vld [vmem:[%s1595 + $0x78] sm:$0xff]
        %1612 = vmatprep.subr.mxu0 0.0
        %1613 = vmatpush1.msra.mxu0 %v1596
        %1614 = vmatprep.subr.mxu0 0.0
        %1615 = vmatpush1.msra.mxu0 %v1597
        %1616 = vmatprep.subr.mxu0 0.0
        %1617 = vmatpush1.msra.mxu0 %v1598
        %1618 = vmatprep.subr.mxu0 0.0
        %1619 = vmatpush1.msra.mxu0 %v1599
        %1620 = vmatprep.subr.mxu0 0.0
        %1621 = vmatpush1.msra.mxu0 %v1600
        %1622 = vmatprep.subr.mxu0 0.0
        %1623 = vmatpush1.msra.mxu0 %v1601
        %1624 = vmatprep.subr.mxu0 0.0
        %1625 = vmatpush1.msra.mxu0 %v1602
        %1626 = vmatprep.subr.mxu0 0.0
        %1627 = vmatpush1.msra.mxu0 %v1603
        %1628 = vmatprep.subr.mxu0 0.0
        %1629 = vmatpush1.msra.mxu0 %v1604
        %1630 = vmatprep.subr.mxu0 0.0
        %1631 = vmatpush1.msra.mxu0 %v1605
        %1632 = vmatprep.subr.mxu0 0.0
        %1633 = vmatpush1.msra.mxu0 %v1606
        %1634 = vmatprep.subr.mxu0 0.0
        %1635 = vmatpush1.msra.mxu0 %v1607
        %1636 = vmatprep.subr.mxu0 0.0
        %1637 = vmatpush1.msra.mxu0 %v1608
        %1638 = vmatprep.subr.mxu0 0.0
        %1639 = vmatpush1.msra.mxu0 %v1609
        %1640 = vmatprep.subr.mxu0 0.0
        %1641 = vmatpush1.msra.mxu0 %v1610
        %1642 = vmatprep.subr.mxu0 0.0
        %1643 = vmatpush1.msra.mxu0 %v1611
        %1644 = vmatprep.subr.mxu0 0.0
        %1645 = vmatpush1.msra.mxu0 0.0
        %1646 = vmatprep.subr.mxu0 0.0
        %1647 = vmatpush1.msra.mxu0 0.0
        %1648 = vmatprep.subr.mxu0 0.0
        %1649 = vmatpush1.msra.mxu0 0.0
        %1650 = vmatprep.subr.mxu0 0.0
        %1651 = vmatpush1.msra.mxu0 0.0
        %1652 = vmatprep.subr.mxu0 0.0
        %1653 = vmatpush1.msra.mxu0 0.0
        %1654 = vmatprep.subr.mxu0 0.0
        %1655 = vmatpush1.msra.mxu0 0.0
        %1656 = vmatprep.subr.mxu0 0.0
        %1657 = vmatpush1.msra.mxu0 0.0
        %1658 = vmatprep.subr.mxu0 0.0
        %1659 = vmatpush1.msra.mxu0 0.0
        %1660 = vmatprep.subr.mxu0 0.0
        %1661 = vmatpush1.msra.mxu0 0.0
        %1662 = vmatprep.subr.mxu0 0.0
        %1663 = vmatpush1.msra.mxu0 0.0
        %1664 = vmatprep.subr.mxu0 0.0
        %1665 = vmatpush1.msra.mxu0 0.0
        %1666 = vmatprep.subr.mxu0 0.0
        %1667 = vmatpush1.msra.mxu0 0.0
        %1668 = vmatprep.subr.mxu0 0.0
        %1669 = vmatpush1.msra.mxu0 0.0
        %1670 = vmatprep.subr.mxu0 0.0
        %1671 = vmatpush1.msra.mxu0 0.0
        %1672 = vmatprep.subr.mxu0 0.0
        %1673 = vmatpush1.msra.mxu0 0.0
        %1674 = vmatprep.subr.mxu0 0.0
        %1675 = vmatpush1.msra.mxu0 0.0
        %1676 = vmatprep.mubr.f32.mxu0 0.0
        %1677 = vmatmul.mubr.f32.gmra.mrb[0].mxu0 %v1410
        %v1678 = vpop.f32.mrb[0].mxu0
        %v1679 = vadd.f32 0.0, %v1678
        %v1680 = vpop.f32.mrb[0].mxu0
        %1681 = vdwg.mxu0
        %v1682 = vadd.f32 %v1594, %v1679
        %s1683 = scalar_lea.vmem %s3, 384
        %v1684 = vld [vmem:[%s1683] sm:$0xff]
        %v1685 = vld [vmem:[%s1683 + $0x8] sm:$0xff]
        %v1686 = vld [vmem:[%s1683 + $0x10] sm:$0xff]
        %v1687 = vld [vmem:[%s1683 + $0x18] sm:$0xff]
        %v1688 = vld [vmem:[%s1683 + $0x20] sm:$0xff]
        %v1689 = vld [vmem:[%s1683 + $0x28] sm:$0xff]
        %v1690 = vld [vmem:[%s1683 + $0x30] sm:$0xff]
        %v1691 = vld [vmem:[%s1683 + $0x38] sm:$0xff]
        %v1692 = vld [vmem:[%s1683 + $0x40] sm:$0xff]
        %v1693 = vld [vmem:[%s1683 + $0x48] sm:$0xff]
        %v1694 = vld [vmem:[%s1683 + $0x50] sm:$0xff]
        %v1695 = vld [vmem:[%s1683 + $0x58] sm:$0xff]
        %v1696 = vld [vmem:[%s1683 + $0x60] sm:$0xff]
        %v1697 = vld [vmem:[%s1683 + $0x68] sm:$0xff]
        %v1698 = vld [vmem:[%s1683 + $0x70] sm:$0xff]
        %v1699 = vld [vmem:[%s1683 + $0x78] sm:$0xff]
        %v1701 = vrot.slane %v1410, 4
        %1703 = vmatprep.subr.mxu0 0.0
        %1704 = vmatpush1.msra.mxu0 %v1684
        %1705 = vmatprep.subr.mxu0 0.0
        %1706 = vmatpush1.msra.mxu0 %v1685
        %1707 = vmatprep.subr.mxu0 0.0
        %1708 = vmatpush1.msra.mxu0 %v1686
        %1709 = vmatprep.subr.mxu0 0.0
        %1710 = vmatpush1.msra.mxu0 %v1687
        %1711 = vmatprep.subr.mxu0 0.0
        %1712 = vmatpush1.msra.mxu0 %v1688
        %1713 = vmatprep.subr.mxu0 0.0
        %1714 = vmatpush1.msra.mxu0 %v1689
        %1715 = vmatprep.subr.mxu0 0.0
        %1716 = vmatpush1.msra.mxu0 %v1690
        %1717 = vmatprep.subr.mxu0 0.0
        %1718 = vmatpush1.msra.mxu0 %v1691
        %1719 = vmatprep.subr.mxu0 0.0
        %1720 = vmatpush1.msra.mxu0 %v1692
        %1721 = vmatprep.subr.mxu0 0.0
        %1722 = vmatpush1.msra.mxu0 %v1693
        %1723 = vmatprep.subr.mxu0 0.0
        %1724 = vmatpush1.msra.mxu0 %v1694
        %1725 = vmatprep.subr.mxu0 0.0
        %1726 = vmatpush1.msra.mxu0 %v1695
        %1727 = vmatprep.subr.mxu0 0.0
        %1728 = vmatpush1.msra.mxu0 %v1696
        %1729 = vmatprep.subr.mxu0 0.0
        %1730 = vmatpush1.msra.mxu0 %v1697
        %1731 = vmatprep.subr.mxu0 0.0
        %1732 = vmatpush1.msra.mxu0 %v1698
        %1733 = vmatprep.subr.mxu0 0.0
        %1734 = vmatpush1.msra.mxu0 %v1699
        %1735 = vmatprep.subr.mxu0 0.0
        %1736 = vmatpush1.msra.mxu0 0.0
        %1737 = vmatprep.subr.mxu0 0.0
        %1738 = vmatpush1.msra.mxu0 0.0
        %1739 = vmatprep.subr.mxu0 0.0
        %1740 = vmatpush1.msra.mxu0 0.0
        %1741 = vmatprep.subr.mxu0 0.0
        %1742 = vmatpush1.msra.mxu0 0.0
        %1743 = vmatprep.subr.mxu0 0.0
        %1744 = vmatpush1.msra.mxu0 0.0
        %1745 = vmatprep.subr.mxu0 0.0
        %1746 = vmatpush1.msra.mxu0 0.0
        %1747 = vmatprep.subr.mxu0 0.0
        %1748 = vmatpush1.msra.mxu0 0.0
        %1749 = vmatprep.subr.mxu0 0.0
        %1750 = vmatpush1.msra.mxu0 0.0
        %1751 = vmatprep.subr.mxu0 0.0
        %1752 = vmatpush1.msra.mxu0 0.0
        %1753 = vmatprep.subr.mxu0 0.0
        %1754 = vmatpush1.msra.mxu0 0.0
        %1755 = vmatprep.subr.mxu0 0.0
        %1756 = vmatpush1.msra.mxu0 0.0
        %1757 = vmatprep.subr.mxu0 0.0
        %1758 = vmatpush1.msra.mxu0 0.0
        %1759 = vmatprep.subr.mxu0 0.0
        %1760 = vmatpush1.msra.mxu0 0.0
        %1761 = vmatprep.subr.mxu0 0.0
        %1762 = vmatpush1.msra.mxu0 0.0
        %1763 = vmatprep.subr.mxu0 0.0
        %1764 = vmatpush1.msra.mxu0 0.0
        %1765 = vmatprep.subr.mxu0 0.0
        %1766 = vmatpush1.msra.mxu0 0.0
        %1767 = vmatprep.mubr.f32.mxu0 0.0
        %1768 = vmatmul.mubr.f32.gmra.mrb[0].mxu0 %v1701
        %v1769 = vpop.f32.mrb[0].mxu0
        %v1770 = vadd.f32 0.0, %v1769
        %v1771 = vpop.f32.mrb[0].mxu0
        %1772 = vdwg.mxu0
        %v1773 = vadd.f32 %v1682, %v1770
        %s1774 = scalar_lea.vmem %s3, 512
        %v1775 = vld [vmem:[%s1774] sm:$0xff]
        %v1776 = vld [vmem:[%s1774 + $0x8] sm:$0xff]
        %v1777 = vld [vmem:[%s1774 + $0x10] sm:$0xff]
        %v1778 = vld [vmem:[%s1774 + $0x18] sm:$0xff]
        %v1779 = vld [vmem:[%s1774 + $0x20] sm:$0xff]
        %v1780 = vld [vmem:[%s1774 + $0x28] sm:$0xff]
        %v1781 = vld [vmem:[%s1774 + $0x30] sm:$0xff]
        %v1782 = vld [vmem:[%s1774 + $0x38] sm:$0xff]
        %v1783 = vld [vmem:[%s1774 + $0x40] sm:$0xff]
        %v1784 = vld [vmem:[%s1774 + $0x48] sm:$0xff]
        %v1785 = vld [vmem:[%s1774 + $0x50] sm:$0xff]
        %v1786 = vld [vmem:[%s1774 + $0x58] sm:$0xff]
        %v1787 = vld [vmem:[%s1774 + $0x60] sm:$0xff]
        %v1788 = vld [vmem:[%s1774 + $0x68] sm:$0xff]
        %v1789 = vld [vmem:[%s1774 + $0x70] sm:$0xff]
        %v1790 = vld [vmem:[%s1774 + $0x78] sm:$0xff]
        %1791 = vmatprep.subr.mxu0 0.0
        %1792 = vmatpush1.msra.mxu0 %v1775
        %1793 = vmatprep.subr.mxu0 0.0
        %1794 = vmatpush1.msra.mxu0 %v1776
        %1795 = vmatprep.subr.mxu0 0.0
        %1796 = vmatpush1.msra.mxu0 %v1777
        %1797 = vmatprep.subr.mxu0 0.0
        %1798 = vmatpush1.msra.mxu0 %v1778
        %1799 = vmatprep.subr.mxu0 0.0
        %1800 = vmatpush1.msra.mxu0 %v1779
        %1801 = vmatprep.subr.mxu0 0.0
        %1802 = vmatpush1.msra.mxu0 %v1780
        %1803 = vmatprep.subr.mxu0 0.0
        %1804 = vmatpush1.msra.mxu0 %v1781
        %1805 = vmatprep.subr.mxu0 0.0
        %1806 = vmatpush1.msra.mxu0 %v1782
        %1807 = vmatprep.subr.mxu0 0.0
        %1808 = vmatpush1.msra.mxu0 %v1783
        %1809 = vmatprep.subr.mxu0 0.0
        %1810 = vmatpush1.msra.mxu0 %v1784
        %1811 = vmatprep.subr.mxu0 0.0
        %1812 = vmatpush1.msra.mxu0 %v1785
        %1813 = vmatprep.subr.mxu0 0.0
        %1814 = vmatpush1.msra.mxu0 %v1786
        %1815 = vmatprep.subr.mxu0 0.0
        %1816 = vmatpush1.msra.mxu0 %v1787
        %1817 = vmatprep.subr.mxu0 0.0
        %1818 = vmatpush1.msra.mxu0 %v1788
        %1819 = vmatprep.subr.mxu0 0.0
        %1820 = vmatpush1.msra.mxu0 %v1789
        %1821 = vmatprep.subr.mxu0 0.0
        %1822 = vmatpush1.msra.mxu0 %v1790
        %1823 = vmatprep.subr.mxu0 0.0
        %1824 = vmatpush1.msra.mxu0 0.0
        %1825 = vmatprep.subr.mxu0 0.0
        %1826 = vmatpush1.msra.mxu0 0.0
        %1827 = vmatprep.subr.mxu0 0.0
        %1828 = vmatpush1.msra.mxu0 0.0
        %1829 = vmatprep.subr.mxu0 0.0
        %1830 = vmatpush1.msra.mxu0 0.0
        %1831 = vmatprep.subr.mxu0 0.0
        %1832 = vmatpush1.msra.mxu0 0.0
        %1833 = vmatprep.subr.mxu0 0.0
        %1834 = vmatpush1.msra.mxu0 0.0
        %1835 = vmatprep.subr.mxu0 0.0
        %1836 = vmatpush1.msra.mxu0 0.0
        %1837 = vmatprep.subr.mxu0 0.0
        %1838 = vmatpush1.msra.mxu0 0.0
        %1839 = vmatprep.subr.mxu0 0.0
        %1840 = vmatpush1.msra.mxu0 0.0
        %1841 = vmatprep.subr.mxu0 0.0
        %1842 = vmatpush1.msra.mxu0 0.0
        %1843 = vmatprep.subr.mxu0 0.0
        %1844 = vmatpush1.msra.mxu0 0.0
        %1845 = vmatprep.subr.mxu0 0.0
        %1846 = vmatpush1.msra.mxu0 0.0
        %1847 = vmatprep.subr.mxu0 0.0
        %1848 = vmatpush1.msra.mxu0 0.0
        %1849 = vmatprep.subr.mxu0 0.0
        %1850 = vmatpush1.msra.mxu0 0.0
        %1851 = vmatprep.subr.mxu0 0.0
        %1852 = vmatpush1.msra.mxu0 0.0
        %1853 = vmatprep.subr.mxu0 0.0
        %1854 = vmatpush1.msra.mxu0 0.0
        %1855 = vmatprep.mubr.f32.mxu0 0.0
        %1856 = vmatmul.mubr.f32.gmra.mrb[0].mxu0 %v1411
        %v1857 = vpop.f32.mrb[0].mxu0
        %v1858 = vadd.f32 0.0, %v1857
        %v1859 = vpop.f32.mrb[0].mxu0
        %1860 = vdwg.mxu0
        %v1861 = vadd.f32 %v1773, %v1858
        %s1862 = scalar_lea.vmem %s3, 640
        %v1863 = vld [vmem:[%s1862] sm:$0xff]
        %v1864 = vld [vmem:[%s1862 + $0x8] sm:$0xff]
        %v1865 = vld [vmem:[%s1862 + $0x10] sm:$0xff]
        %v1866 = vld [vmem:[%s1862 + $0x18] sm:$0xff]
        %v1867 = vld [vmem:[%s1862 + $0x20] sm:$0xff]
        %v1868 = vld [vmem:[%s1862 + $0x28] sm:$0xff]
        %v1869 = vld [vmem:[%s1862 + $0x30] sm:$0xff]
        %v1870 = vld [vmem:[%s1862 + $0x38] sm:$0xff]
        %v1871 = vld [vmem:[%s1862 + $0x40] sm:$0xff]
        %v1872 = vld [vmem:[%s1862 + $0x48] sm:$0xff]
        %v1873 = vld [vmem:[%s1862 + $0x50] sm:$0xff]
        %v1874 = vld [vmem:[%s1862 + $0x58] sm:$0xff]
        %v1875 = vld [vmem:[%s1862 + $0x60] sm:$0xff]
        %v1876 = vld [vmem:[%s1862 + $0x68] sm:$0xff]
        %v1877 = vld [vmem:[%s1862 + $0x70] sm:$0xff]
        %v1878 = vld [vmem:[%s1862 + $0x78] sm:$0xff]
        %v1880 = vrot.slane %v1411, 4
        %1882 = vmatprep.subr.mxu0 0.0
        %1883 = vmatpush1.msra.mxu0 %v1863
        %1884 = vmatprep.subr.mxu0 0.0
        %1885 = vmatpush1.msra.mxu0 %v1864
        %1886 = vmatprep.subr.mxu0 0.0
        %1887 = vmatpush1.msra.mxu0 %v1865
        %1888 = vmatprep.subr.mxu0 0.0
        %1889 = vmatpush1.msra.mxu0 %v1866
        %1890 = vmatprep.subr.mxu0 0.0
        %1891 = vmatpush1.msra.mxu0 %v1867
        %1892 = vmatprep.subr.mxu0 0.0
        %1893 = vmatpush1.msra.mxu0 %v1868
        %1894 = vmatprep.subr.mxu0 0.0
        %1895 = vmatpush1.msra.mxu0 %v1869
        %1896 = vmatprep.subr.mxu0 0.0
        %1897 = vmatpush1.msra.mxu0 %v1870
        %1898 = vmatprep.subr.mxu0 0.0
        %1899 = vmatpush1.msra.mxu0 %v1871
        %1900 = vmatprep.subr.mxu0 0.0
        %1901 = vmatpush1.msra.mxu0 %v1872
        %1902 = vmatprep.subr.mxu0 0.0
        %1903 = vmatpush1.msra.mxu0 %v1873
        %1904 = vmatprep.subr.mxu0 0.0
        %1905 = vmatpush1.msra.mxu0 %v1874
        %1906 = vmatprep.subr.mxu0 0.0
        %1907 = vmatpush1.msra.mxu0 %v1875
        %1908 = vmatprep.subr.mxu0 0.0
        %1909 = vmatpush1.msra.mxu0 %v1876
        %1910 = vmatprep.subr.mxu0 0.0
        %1911 = vmatpush1.msra.mxu0 %v1877
        %1912 = vmatprep.subr.mxu0 0.0
        %1913 = vmatpush1.msra.mxu0 %v1878
        %1914 = vmatprep.subr.mxu0 0.0
        %1915 = vmatpush1.msra.mxu0 0.0
        %1916 = vmatprep.subr.mxu0 0.0
        %1917 = vmatpush1.msra.mxu0 0.0
        %1918 = vmatprep.subr.mxu0 0.0
        %1919 = vmatpush1.msra.mxu0 0.0
        %1920 = vmatprep.subr.mxu0 0.0
        %1921 = vmatpush1.msra.mxu0 0.0
        %1922 = vmatprep.subr.mxu0 0.0
        %1923 = vmatpush1.msra.mxu0 0.0
        %1924 = vmatprep.subr.mxu0 0.0
        %1925 = vmatpush1.msra.mxu0 0.0
        %1926 = vmatprep.subr.mxu0 0.0
        %1927 = vmatpush1.msra.mxu0 0.0
        %1928 = vmatprep.subr.mxu0 0.0
        %1929 = vmatpush1.msra.mxu0 0.0
        %1930 = vmatprep.subr.mxu0 0.0
        %1931 = vmatpush1.msra.mxu0 0.0
        %1932 = vmatprep.subr.mxu0 0.0
        %1933 = vmatpush1.msra.mxu0 0.0
        %1934 = vmatprep.subr.mxu0 0.0
        %1935 = vmatpush1.msra.mxu0 0.0
        %1936 = vmatprep.subr.mxu0 0.0
        %1937 = vmatpush1.msra.mxu0 0.0
        %1938 = vmatprep.subr.mxu0 0.0
        %1939 = vmatpush1.msra.mxu0 0.0
        %1940 = vmatprep.subr.mxu0 0.0
        %1941 = vmatpush1.msra.mxu0 0.0
        %1942 = vmatprep.subr.mxu0 0.0
        %1943 = vmatpush1.msra.mxu0 0.0
        %1944 = vmatprep.subr.mxu0 0.0
        %1945 = vmatpush1.msra.mxu0 0.0
        %1946 = vmatprep.mubr.f32.mxu0 0.0
        %1947 = vmatmul.mubr.f32.gmra.mrb[0].mxu0 %v1880
        %v1948 = vpop.f32.mrb[0].mxu0
        %v1949 = vadd.f32 0.0, %v1948
        %v1950 = vpop.f32.mrb[0].mxu0
        %1951 = vdwg.mxu0
        %v1952 = vadd.f32 %v1861, %v1949
        %s1953 = scalar_lea.vmem %s3, 768
        %v1954 = vld [vmem:[%s1953] sm:$0xff]
        %v1955 = vld [vmem:[%s1953 + $0x8] sm:$0xff]
        %v1956 = vld [vmem:[%s1953 + $0x10] sm:$0xff]
        %v1957 = vld [vmem:[%s1953 + $0x18] sm:$0xff]
        %v1958 = vld [vmem:[%s1953 + $0x20] sm:$0xff]
        %v1959 = vld [vmem:[%s1953 + $0x28] sm:$0xff]
        %v1960 = vld [vmem:[%s1953 + $0x30] sm:$0xff]
        %v1961 = vld [vmem:[%s1953 + $0x38] sm:$0xff]
        %v1962 = vld [vmem:[%s1953 + $0x40] sm:$0xff]
        %v1963 = vld [vmem:[%s1953 + $0x48] sm:$0xff]
        %v1964 = vld [vmem:[%s1953 + $0x50] sm:$0xff]
        %v1965 = vld [vmem:[%s1953 + $0x58] sm:$0xff]
        %v1966 = vld [vmem:[%s1953 + $0x60] sm:$0xff]
        %v1967 = vld [vmem:[%s1953 + $0x68] sm:$0xff]
        %v1968 = vld [vmem:[%s1953 + $0x70] sm:$0xff]
        %v1969 = vld [vmem:[%s1953 + $0x78] sm:$0xff]
        %1970 = vmatprep.subr.mxu0 0.0
        %1971 = vmatpush1.msra.mxu0 %v1954
        %1972 = vmatprep.subr.mxu0 0.0
        %1973 = vmatpush1.msra.mxu0 %v1955
        %1974 = vmatprep.subr.mxu0 0.0
        %1975 = vmatpush1.msra.mxu0 %v1956
        %1976 = vmatprep.subr.mxu0 0.0
        %1977 = vmatpush1.msra.mxu0 %v1957
        %1978 = vmatprep.subr.mxu0 0.0
        %1979 = vmatpush1.msra.mxu0 %v1958
        %1980 = vmatprep.subr.mxu0 0.0
        %1981 = vmatpush1.msra.mxu0 %v1959
        %1982 = vmatprep.subr.mxu0 0.0
        %1983 = vmatpush1.msra.mxu0 %v1960
        %1984 = vmatprep.subr.mxu0 0.0
        %1985 = vmatpush1.msra.mxu0 %v1961
        %1986 = vmatprep.subr.mxu0 0.0
        %1987 = vmatpush1.msra.mxu0 %v1962
        %1988 = vmatprep.subr.mxu0 0.0
        %1989 = vmatpush1.msra.mxu0 %v1963
        %1990 = vmatprep.subr.mxu0 0.0
        %1991 = vmatpush1.msra.mxu0 %v1964
        %1992 = vmatprep.subr.mxu0 0.0
        %1993 = vmatpush1.msra.mxu0 %v1965
        %1994 = vmatprep.subr.mxu0 0.0
        %1995 = vmatpush1.msra.mxu0 %v1966
        %1996 = vmatprep.subr.mxu0 0.0
        %1997 = vmatpush1.msra.mxu0 %v1967
        %1998 = vmatprep.subr.mxu0 0.0
        %1999 = vmatpush1.msra.mxu0 %v1968
        %2000 = vmatprep.subr.mxu0 0.0
        %2001 = vmatpush1.msra.mxu0 %v1969
        %2002 = vmatprep.subr.mxu0 0.0
        %2003 = vmatpush1.msra.mxu0 0.0
        %2004 = vmatprep.subr.mxu0 0.0
        %2005 = vmatpush1.msra.mxu0 0.0
        %2006 = vmatprep.subr.mxu0 0.0
        %2007 = vmatpush1.msra.mxu0 0.0
        %2008 = vmatprep.subr.mxu0 0.0
        %2009 = vmatpush1.msra.mxu0 0.0
        %2010 = vmatprep.subr.mxu0 0.0
        %2011 = vmatpush1.msra.mxu0 0.0
        %2012 = vmatprep.subr.mxu0 0.0
        %2013 = vmatpush1.msra.mxu0 0.0
        %2014 = vmatprep.subr.mxu0 0.0
        %2015 = vmatpush1.msra.mxu0 0.0
        %2016 = vmatprep.subr.mxu0 0.0
        %2017 = vmatpush1.msra.mxu0 0.0
        %2018 = vmatprep.subr.mxu0 0.0
        %2019 = vmatpush1.msra.mxu0 0.0
        %2020 = vmatprep.subr.mxu0 0.0
        %2021 = vmatpush1.msra.mxu0 0.0
        %2022 = vmatprep.subr.mxu0 0.0
        %2023 = vmatpush1.msra.mxu0 0.0
        %2024 = vmatprep.subr.mxu0 0.0
        %2025 = vmatpush1.msra.mxu0 0.0
        %2026 = vmatprep.subr.mxu0 0.0
        %2027 = vmatpush1.msra.mxu0 0.0
        %2028 = vmatprep.subr.mxu0 0.0
        %2029 = vmatpush1.msra.mxu0 0.0
        %2030 = vmatprep.subr.mxu0 0.0
        %2031 = vmatpush1.msra.mxu0 0.0
        %2032 = vmatprep.subr.mxu0 0.0
        %2033 = vmatpush1.msra.mxu0 0.0
        %2034 = vmatprep.mubr.f32.mxu0 0.0
        %2035 = vmatmul.mubr.f32.gmra.mrb[0].mxu0 %v1412
        %v2036 = vpop.f32.mrb[0].mxu0
        %v2037 = vadd.f32 0.0, %v2036
        %v2038 = vpop.f32.mrb[0].mxu0
        %2039 = vdwg.mxu0
        %v2040 = vadd.f32 %v1952, %v2037
        %s2041 = scalar_lea.vmem %s3, 896
        %v2042 = vld [vmem:[%s2041] sm:$0xff]
        %v2043 = vld [vmem:[%s2041 + $0x8] sm:$0xff]
        %v2044 = vld [vmem:[%s2041 + $0x10] sm:$0xff]
        %v2045 = vld [vmem:[%s2041 + $0x18] sm:$0xff]
        %v2046 = vld [vmem:[%s2041 + $0x20] sm:$0xff]
        %v2047 = vld [vmem:[%s2041 + $0x28] sm:$0xff]
        %v2048 = vld [vmem:[%s2041 + $0x30] sm:$0xff]
        %v2049 = vld [vmem:[%s2041 + $0x38] sm:$0xff]
        %v2050 = vld [vmem:[%s2041 + $0x40] sm:$0xff]
        %v2051 = vld [vmem:[%s2041 + $0x48] sm:$0xff]
        %v2052 = vld [vmem:[%s2041 + $0x50] sm:$0xff]
        %v2053 = vld [vmem:[%s2041 + $0x58] sm:$0xff]
        %v2054 = vld [vmem:[%s2041 + $0x60] sm:$0xff]
        %v2055 = vld [vmem:[%s2041 + $0x68] sm:$0xff]
        %v2056 = vld [vmem:[%s2041 + $0x70] sm:$0xff]
        %v2057 = vld [vmem:[%s2041 + $0x78] sm:$0xff]
        %v2059 = vrot.slane %v1412, 4
        %2061 = vmatprep.subr.mxu0 0.0
        %2062 = vmatpush1.msra.mxu0 %v2042
        %2063 = vmatprep.subr.mxu0 0.0
        %2064 = vmatpush1.msra.mxu0 %v2043
        %2065 = vmatprep.subr.mxu0 0.0
        %2066 = vmatpush1.msra.mxu0 %v2044
        %2067 = vmatprep.subr.mxu0 0.0
        %2068 = vmatpush1.msra.mxu0 %v2045
        %2069 = vmatprep.subr.mxu0 0.0
        %2070 = vmatpush1.msra.mxu0 %v2046
        %2071 = vmatprep.subr.mxu0 0.0
        %2072 = vmatpush1.msra.mxu0 %v2047
        %2073 = vmatprep.subr.mxu0 0.0
        %2074 = vmatpush1.msra.mxu0 %v2048
        %2075 = vmatprep.subr.mxu0 0.0
        %2076 = vmatpush1.msra.mxu0 %v2049
        %2077 = vmatprep.subr.mxu0 0.0
        %2078 = vmatpush1.msra.mxu0 %v2050
        %2079 = vmatprep.subr.mxu0 0.0
        %2080 = vmatpush1.msra.mxu0 %v2051
        %2081 = vmatprep.subr.mxu0 0.0
        %2082 = vmatpush1.msra.mxu0 %v2052
        %2083 = vmatprep.subr.mxu0 0.0
        %2084 = vmatpush1.msra.mxu0 %v2053
        %2085 = vmatprep.subr.mxu0 0.0
        %2086 = vmatpush1.msra.mxu0 %v2054
        %2087 = vmatprep.subr.mxu0 0.0
        %2088 = vmatpush1.msra.mxu0 %v2055
        %2089 = vmatprep.subr.mxu0 0.0
        %2090 = vmatpush1.msra.mxu0 %v2056
        %2091 = vmatprep.subr.mxu0 0.0
        %2092 = vmatpush1.msra.mxu0 %v2057
        %2093 = vmatprep.subr.mxu0 0.0
        %2094 = vmatpush1.msra.mxu0 0.0
        %2095 = vmatprep.subr.mxu0 0.0
        %2096 = vmatpush1.msra.mxu0 0.0
        %2097 = vmatprep.subr.mxu0 0.0
        %2098 = vmatpush1.msra.mxu0 0.0
        %2099 = vmatprep.subr.mxu0 0.0
        %2100 = vmatpush1.msra.mxu0 0.0
        %2101 = vmatprep.subr.mxu0 0.0
        %2102 = vmatpush1.msra.mxu0 0.0
        %2103 = vmatprep.subr.mxu0 0.0
        %2104 = vmatpush1.msra.mxu0 0.0
        %2105 = vmatprep.subr.mxu0 0.0
        %2106 = vmatpush1.msra.mxu0 0.0
        %2107 = vmatprep.subr.mxu0 0.0
        %2108 = vmatpush1.msra.mxu0 0.0
        %2109 = vmatprep.subr.mxu0 0.0
        %2110 = vmatpush1.msra.mxu0 0.0
        %2111 = vmatprep.subr.mxu0 0.0
        %2112 = vmatpush1.msra.mxu0 0.0
        %2113 = vmatprep.subr.mxu0 0.0
        %2114 = vmatpush1.msra.mxu0 0.0
        %2115 = vmatprep.subr.mxu0 0.0
        %2116 = vmatpush1.msra.mxu0 0.0
        %2117 = vmatprep.subr.mxu0 0.0
        %2118 = vmatpush1.msra.mxu0 0.0
        %2119 = vmatprep.subr.mxu0 0.0
        %2120 = vmatpush1.msra.mxu0 0.0
        %2121 = vmatprep.subr.mxu0 0.0
        %2122 = vmatpush1.msra.mxu0 0.0
        %2123 = vmatprep.subr.mxu0 0.0
        %2124 = vmatpush1.msra.mxu0 0.0
        %2125 = vmatprep.mubr.f32.mxu0 0.0
        %2126 = vmatmul.mubr.f32.gmra.mrb[0].mxu0 %v2059
        %v2127 = vpop.f32.mrb[0].mxu0
        %v2128 = vadd.f32 0.0, %v2127
        %v2129 = vpop.f32.mrb[0].mxu0
        %2130 = vdwg.mxu0
        %v2131 = vadd.f32 %v2040, %v2128
        %s2132 = scalar_lea.vmem %s3, 1024
        %v2133 = vld [vmem:[%s2132] sm:$0xff]
        %v2134 = vld [vmem:[%s2132 + $0x8] sm:$0xff]
        %v2135 = vld [vmem:[%s2132 + $0x10] sm:$0xff]
        %v2136 = vld [vmem:[%s2132 + $0x18] sm:$0xff]
        %v2137 = vld [vmem:[%s2132 + $0x20] sm:$0xff]
        %v2138 = vld [vmem:[%s2132 + $0x28] sm:$0xff]
        %v2139 = vld [vmem:[%s2132 + $0x30] sm:$0xff]
        %v2140 = vld [vmem:[%s2132 + $0x38] sm:$0xff]
        %v2141 = vld [vmem:[%s2132 + $0x40] sm:$0xff]
        %v2142 = vld [vmem:[%s2132 + $0x48] sm:$0xff]
        %v2143 = vld [vmem:[%s2132 + $0x50] sm:$0xff]
        %v2144 = vld [vmem:[%s2132 + $0x58] sm:$0xff]
        %v2145 = vld [vmem:[%s2132 + $0x60] sm:$0xff]
        %v2146 = vld [vmem:[%s2132 + $0x68] sm:$0xff]
        %v2147 = vld [vmem:[%s2132 + $0x70] sm:$0xff]
        %v2148 = vld [vmem:[%s2132 + $0x78] sm:$0xff]
        %2149 = vmatprep.subr.mxu0 0.0
        %2150 = vmatpush1.msra.mxu0 %v2133
        %2151 = vmatprep.subr.mxu0 0.0
        %2152 = vmatpush1.msra.mxu0 %v2134
        %2153 = vmatprep.subr.mxu0 0.0
        %2154 = vmatpush1.msra.mxu0 %v2135
        %2155 = vmatprep.subr.mxu0 0.0
        %2156 = vmatpush1.msra.mxu0 %v2136
        %2157 = vmatprep.subr.mxu0 0.0
        %2158 = vmatpush1.msra.mxu0 %v2137
        %2159 = vmatprep.subr.mxu0 0.0
        %2160 = vmatpush1.msra.mxu0 %v2138
        %2161 = vmatprep.subr.mxu0 0.0
        %2162 = vmatpush1.msra.mxu0 %v2139
        %2163 = vmatprep.subr.mxu0 0.0
        %2164 = vmatpush1.msra.mxu0 %v2140
        %2165 = vmatprep.subr.mxu0 0.0
        %2166 = vmatpush1.msra.mxu0 %v2141
        %2167 = vmatprep.subr.mxu0 0.0
        %2168 = vmatpush1.msra.mxu0 %v2142
        %2169 = vmatprep.subr.mxu0 0.0
        %2170 = vmatpush1.msra.mxu0 %v2143
        %2171 = vmatprep.subr.mxu0 0.0
        %2172 = vmatpush1.msra.mxu0 %v2144
        %2173 = vmatprep.subr.mxu0 0.0
        %2174 = vmatpush1.msra.mxu0 %v2145
        %2175 = vmatprep.subr.mxu0 0.0
        %2176 = vmatpush1.msra.mxu0 %v2146
        %2177 = vmatprep.subr.mxu0 0.0
        %2178 = vmatpush1.msra.mxu0 %v2147
        %2179 = vmatprep.subr.mxu0 0.0
        %2180 = vmatpush1.msra.mxu0 %v2148
        %2181 = vmatprep.subr.mxu0 0.0
        %2182 = vmatpush1.msra.mxu0 0.0
        %2183 = vmatprep.subr.mxu0 0.0
        %2184 = vmatpush1.msra.mxu0 0.0
        %2185 = vmatprep.subr.mxu0 0.0
        %2186 = vmatpush1.msra.mxu0 0.0
        %2187 = vmatprep.subr.mxu0 0.0
        %2188 = vmatpush1.msra.mxu0 0.0
        %2189 = vmatprep.subr.mxu0 0.0
        %2190 = vmatpush1.msra.mxu0 0.0
        %2191 = vmatprep.subr.mxu0 0.0
        %2192 = vmatpush1.msra.mxu0 0.0
        %2193 = vmatprep.subr.mxu0 0.0
        %2194 = vmatpush1.msra.mxu0 0.0
        %2195 = vmatprep.subr.mxu0 0.0
        %2196 = vmatpush1.msra.mxu0 0.0
        %2197 = vmatprep.subr.mxu0 0.0
        %2198 = vmatpush1.msra.mxu0 0.0
        %2199 = vmatprep.subr.mxu0 0.0
        %2200 = vmatpush1.msra.mxu0 0.0
        %2201 = vmatprep.subr.mxu0 0.0
        %2202 = vmatpush1.msra.mxu0 0.0
        %2203 = vmatprep.subr.mxu0 0.0
        %2204 = vmatpush1.msra.mxu0 0.0
        %2205 = vmatprep.subr.mxu0 0.0
        %2206 = vmatpush1.msra.mxu0 0.0
        %2207 = vmatprep.subr.mxu0 0.0
        %2208 = vmatpush1.msra.mxu0 0.0
        %2209 = vmatprep.subr.mxu0 0.0
        %2210 = vmatpush1.msra.mxu0 0.0
        %2211 = vmatprep.subr.mxu0 0.0
        %2212 = vmatpush1.msra.mxu0 0.0
        %2213 = vmatprep.mubr.f32.mxu0 0.0
        %2214 = vmatmul.mubr.f32.gmra.mrb[0].mxu0 %v1413
        %v2215 = vpop.f32.mrb[0].mxu0
        %v2216 = vadd.f32 0.0, %v2215
        %v2217 = vpop.f32.mrb[0].mxu0
        %2218 = vdwg.mxu0
        %v2219 = vadd.f32 %v2131, %v2216
        %s2220 = scalar_lea.vmem %s3, 1152
        %v2221 = vld [vmem:[%s2220] sm:$0xff]
        %v2222 = vld [vmem:[%s2220 + $0x8] sm:$0xff]
        %v2223 = vld [vmem:[%s2220 + $0x10] sm:$0xff]
        %v2224 = vld [vmem:[%s2220 + $0x18] sm:$0xff]
        %v2225 = vld [vmem:[%s2220 + $0x20] sm:$0xff]
        %v2226 = vld [vmem:[%s2220 + $0x28] sm:$0xff]
        %v2227 = vld [vmem:[%s2220 + $0x30] sm:$0xff]
        %v2228 = vld [vmem:[%s2220 + $0x38] sm:$0xff]
        %v2229 = vld [vmem:[%s2220 + $0x40] sm:$0xff]
        %v2230 = vld [vmem:[%s2220 + $0x48] sm:$0xff]
        %v2231 = vld [vmem:[%s2220 + $0x50] sm:$0xff]
        %v2232 = vld [vmem:[%s2220 + $0x58] sm:$0xff]
        %v2233 = vld [vmem:[%s2220 + $0x60] sm:$0xff]
        %v2234 = vld [vmem:[%s2220 + $0x68] sm:$0xff]
        %v2235 = vld [vmem:[%s2220 + $0x70] sm:$0xff]
        %v2236 = vld [vmem:[%s2220 + $0x78] sm:$0xff]
        %v2238 = vrot.slane %v1413, 4
        %2240 = vmatprep.subr.mxu0 0.0
        %2241 = vmatpush1.msra.mxu0 %v2221
        %2242 = vmatprep.subr.mxu0 0.0
        %2243 = vmatpush1.msra.mxu0 %v2222
        %2244 = vmatprep.subr.mxu0 0.0
        %2245 = vmatpush1.msra.mxu0 %v2223
        %2246 = vmatprep.subr.mxu0 0.0
        %2247 = vmatpush1.msra.mxu0 %v2224
        %2248 = vmatprep.subr.mxu0 0.0
        %2249 = vmatpush1.msra.mxu0 %v2225
        %2250 = vmatprep.subr.mxu0 0.0
        %2251 = vmatpush1.msra.mxu0 %v2226
        %2252 = vmatprep.subr.mxu0 0.0
        %2253 = vmatpush1.msra.mxu0 %v2227
        %2254 = vmatprep.subr.mxu0 0.0
        %2255 = vmatpush1.msra.mxu0 %v2228
        %2256 = vmatprep.subr.mxu0 0.0
        %2257 = vmatpush1.msra.mxu0 %v2229
        %2258 = vmatprep.subr.mxu0 0.0
        %2259 = vmatpush1.msra.mxu0 %v2230
        %2260 = vmatprep.subr.mxu0 0.0
        %2261 = vmatpush1.msra.mxu0 %v2231
        %2262 = vmatprep.subr.mxu0 0.0
        %2263 = vmatpush1.msra.mxu0 %v2232
        %2264 = vmatprep.subr.mxu0 0.0
        %2265 = vmatpush1.msra.mxu0 %v2233
        %2266 = vmatprep.subr.mxu0 0.0
        %2267 = vmatpush1.msra.mxu0 %v2234
        %2268 = vmatprep.subr.mxu0 0.0
        %2269 = vmatpush1.msra.mxu0 %v2235
        %2270 = vmatprep.subr.mxu0 0.0
        %2271 = vmatpush1.msra.mxu0 %v2236
        %2272 = vmatprep.subr.mxu0 0.0
        %2273 = vmatpush1.msra.mxu0 0.0
        %2274 = vmatprep.subr.mxu0 0.0
        %2275 = vmatpush1.msra.mxu0 0.0
        %2276 = vmatprep.subr.mxu0 0.0
        %2277 = vmatpush1.msra.mxu0 0.0
        %2278 = vmatprep.subr.mxu0 0.0
        %2279 = vmatpush1.msra.mxu0 0.0
        %2280 = vmatprep.subr.mxu0 0.0
        %2281 = vmatpush1.msra.mxu0 0.0
        %2282 = vmatprep.subr.mxu0 0.0
        %2283 = vmatpush1.msra.mxu0 0.0
        %2284 = vmatprep.subr.mxu0 0.0
        %2285 = vmatpush1.msra.mxu0 0.0
        %2286 = vmatprep.subr.mxu0 0.0
        %2287 = vmatpush1.msra.mxu0 0.0
        %2288 = vmatprep.subr.mxu0 0.0
        %2289 = vmatpush1.msra.mxu0 0.0
        %2290 = vmatprep.subr.mxu0 0.0
        %2291 = vmatpush1.msra.mxu0 0.0
        %2292 = vmatprep.subr.mxu0 0.0
        %2293 = vmatpush1.msra.mxu0 0.0
        %2294 = vmatprep.subr.mxu0 0.0
        %2295 = vmatpush1.msra.mxu0 0.0
        %2296 = vmatprep.subr.mxu0 0.0
        %2297 = vmatpush1.msra.mxu0 0.0
        %2298 = vmatprep.subr.mxu0 0.0
        %2299 = vmatpush1.msra.mxu0 0.0
        %2300 = vmatprep.subr.mxu0 0.0
        %2301 = vmatpush1.msra.mxu0 0.0
        %2302 = vmatprep.subr.mxu0 0.0
        %2303 = vmatpush1.msra.mxu0 0.0
        %2304 = vmatprep.mubr.f32.mxu0 0.0
        %2305 = vmatmul.mubr.f32.gmra.mrb[0].mxu0 %v2238
        %v2306 = vpop.f32.mrb[0].mxu0
        %v2307 = vadd.f32 0.0, %v2306
        %v2308 = vpop.f32.mrb[0].mxu0
        %2309 = vdwg.mxu0
        %v2310 = vadd.f32 %v2219, %v2307
        %s2311 = scalar_lea.vmem %s3, 1280
        %v2312 = vld [vmem:[%s2311] sm:$0xff]
        %v2313 = vld [vmem:[%s2311 + $0x8] sm:$0xff]
        %v2314 = vld [vmem:[%s2311 + $0x10] sm:$0xff]
        %v2315 = vld [vmem:[%s2311 + $0x18] sm:$0xff]
        %v2316 = vld [vmem:[%s2311 + $0x20] sm:$0xff]
        %v2317 = vld [vmem:[%s2311 + $0x28] sm:$0xff]
        %v2318 = vld [vmem:[%s2311 + $0x30] sm:$0xff]
        %v2319 = vld [vmem:[%s2311 + $0x38] sm:$0xff]
        %v2320 = vld [vmem:[%s2311 + $0x40] sm:$0xff]
        %v2321 = vld [vmem:[%s2311 + $0x48] sm:$0xff]
        %v2322 = vld [vmem:[%s2311 + $0x50] sm:$0xff]
        %v2323 = vld [vmem:[%s2311 + $0x58] sm:$0xff]
        %v2324 = vld [vmem:[%s2311 + $0x60] sm:$0xff]
        %v2325 = vld [vmem:[%s2311 + $0x68] sm:$0xff]
        %v2326 = vld [vmem:[%s2311 + $0x70] sm:$0xff]
        %v2327 = vld [vmem:[%s2311 + $0x78] sm:$0xff]
        %2328 = vmatprep.subr.mxu0 0.0
        %2329 = vmatpush1.msra.mxu0 %v2312
        %2330 = vmatprep.subr.mxu0 0.0
        %2331 = vmatpush1.msra.mxu0 %v2313
        %2332 = vmatprep.subr.mxu0 0.0
        %2333 = vmatpush1.msra.mxu0 %v2314
        %2334 = vmatprep.subr.mxu0 0.0
        %2335 = vmatpush1.msra.mxu0 %v2315
        %2336 = vmatprep.subr.mxu0 0.0
        %2337 = vmatpush1.msra.mxu0 %v2316
        %2338 = vmatprep.subr.mxu0 0.0
        %2339 = vmatpush1.msra.mxu0 %v2317
        %2340 = vmatprep.subr.mxu0 0.0
        %2341 = vmatpush1.msra.mxu0 %v2318
        %2342 = vmatprep.subr.mxu0 0.0
        %2343 = vmatpush1.msra.mxu0 %v2319
        %2344 = vmatprep.subr.mxu0 0.0
        %2345 = vmatpush1.msra.mxu0 %v2320
        %2346 = vmatprep.subr.mxu0 0.0
        %2347 = vmatpush1.msra.mxu0 %v2321
        %2348 = vmatprep.subr.mxu0 0.0
        %2349 = vmatpush1.msra.mxu0 %v2322
        %2350 = vmatprep.subr.mxu0 0.0
        %2351 = vmatpush1.msra.mxu0 %v2323
        %2352 = vmatprep.subr.mxu0 0.0
        %2353 = vmatpush1.msra.mxu0 %v2324
        %2354 = vmatprep.subr.mxu0 0.0
        %2355 = vmatpush1.msra.mxu0 %v2325
        %2356 = vmatprep.subr.mxu0 0.0
        %2357 = vmatpush1.msra.mxu0 %v2326
        %2358 = vmatprep.subr.mxu0 0.0
        %2359 = vmatpush1.msra.mxu0 %v2327
        %2360 = vmatprep.subr.mxu0 0.0
        %2361 = vmatpush1.msra.mxu0 0.0
        %2362 = vmatprep.subr.mxu0 0.0
        %2363 = vmatpush1.msra.mxu0 0.0
        %2364 = vmatprep.subr.mxu0 0.0
        %2365 = vmatpush1.msra.mxu0 0.0
        %2366 = vmatprep.subr.mxu0 0.0
        %2367 = vmatpush1.msra.mxu0 0.0
        %2368 = vmatprep.subr.mxu0 0.0
        %2369 = vmatpush1.msra.mxu0 0.0
        %2370 = vmatprep.subr.mxu0 0.0
        %2371 = vmatpush1.msra.mxu0 0.0
        %2372 = vmatprep.subr.mxu0 0.0
        %2373 = vmatpush1.msra.mxu0 0.0
        %2374 = vmatprep.subr.mxu0 0.0
        %2375 = vmatpush1.msra.mxu0 0.0
        %2376 = vmatprep.subr.mxu0 0.0
        %2377 = vmatpush1.msra.mxu0 0.0
        %2378 = vmatprep.subr.mxu0 0.0
        %2379 = vmatpush1.msra.mxu0 0.0
        %2380 = vmatprep.subr.mxu0 0.0
        %2381 = vmatpush1.msra.mxu0 0.0
        %2382 = vmatprep.subr.mxu0 0.0
        %2383 = vmatpush1.msra.mxu0 0.0
        %2384 = vmatprep.subr.mxu0 0.0
        %2385 = vmatpush1.msra.mxu0 0.0
        %2386 = vmatprep.subr.mxu0 0.0
        %2387 = vmatpush1.msra.mxu0 0.0
        %2388 = vmatprep.subr.mxu0 0.0
        %2389 = vmatpush1.msra.mxu0 0.0
        %2390 = vmatprep.subr.mxu0 0.0
        %2391 = vmatpush1.msra.mxu0 0.0
        %2392 = vmatprep.mubr.f32.mxu0 0.0
        %2393 = vmatmul.mubr.f32.gmra.mrb[0].mxu0 %v1414
        %v2394 = vpop.f32.mrb[0].mxu0
        %v2395 = vadd.f32 0.0, %v2394
        %v2396 = vpop.f32.mrb[0].mxu0
        %2397 = vdwg.mxu0
        %v2398 = vadd.f32 %v2310, %v2395
        %s2399 = scalar_lea.vmem %s3, 1408
        %v2400 = vld [vmem:[%s2399] sm:$0xff]
        %v2401 = vld [vmem:[%s2399 + $0x8] sm:$0xff]
        %v2402 = vld [vmem:[%s2399 + $0x10] sm:$0xff]
        %v2403 = vld [vmem:[%s2399 + $0x18] sm:$0xff]
        %v2404 = vld [vmem:[%s2399 + $0x20] sm:$0xff]
        %v2405 = vld [vmem:[%s2399 + $0x28] sm:$0xff]
        %v2406 = vld [vmem:[%s2399 + $0x30] sm:$0xff]
        %v2407 = vld [vmem:[%s2399 + $0x38] sm:$0xff]
        %v2408 = vld [vmem:[%s2399 + $0x40] sm:$0xff]
        %v2409 = vld [vmem:[%s2399 + $0x48] sm:$0xff]
        %v2410 = vld [vmem:[%s2399 + $0x50] sm:$0xff]
        %v2411 = vld [vmem:[%s2399 + $0x58] sm:$0xff]
        %v2412 = vld [vmem:[%s2399 + $0x60] sm:$0xff]
        %v2413 = vld [vmem:[%s2399 + $0x68] sm:$0xff]
        %v2414 = vld [vmem:[%s2399 + $0x70] sm:$0xff]
        %v2415 = vld [vmem:[%s2399 + $0x78] sm:$0xff]
        %v2417 = vrot.slane %v1414, 4
        %2419 = vmatprep.subr.mxu0 0.0
        %2420 = vmatpush1.msra.mxu0 %v2400
        %2421 = vmatprep.subr.mxu0 0.0
        %2422 = vmatpush1.msra.mxu0 %v2401
        %2423 = vmatprep.subr.mxu0 0.0
        %2424 = vmatpush1.msra.mxu0 %v2402
        %2425 = vmatprep.subr.mxu0 0.0
        %2426 = vmatpush1.msra.mxu0 %v2403
        %2427 = vmatprep.subr.mxu0 0.0
        %2428 = vmatpush1.msra.mxu0 %v2404
        %2429 = vmatprep.subr.mxu0 0.0
        %2430 = vmatpush1.msra.mxu0 %v2405
        %2431 = vmatprep.subr.mxu0 0.0
        %2432 = vmatpush1.msra.mxu0 %v2406
        %2433 = vmatprep.subr.mxu0 0.0
        %2434 = vmatpush1.msra.mxu0 %v2407
        %2435 = vmatprep.subr.mxu0 0.0
        %2436 = vmatpush1.msra.mxu0 %v2408
        %2437 = vmatprep.subr.mxu0 0.0
        %2438 = vmatpush1.msra.mxu0 %v2409
        %2439 = vmatprep.subr.mxu0 0.0
        %2440 = vmatpush1.msra.mxu0 %v2410
        %2441 = vmatprep.subr.mxu0 0.0
        %2442 = vmatpush1.msra.mxu0 %v2411
        %2443 = vmatprep.subr.mxu0 0.0
        %2444 = vmatpush1.msra.mxu0 %v2412
        %2445 = vmatprep.subr.mxu0 0.0
        %2446 = vmatpush1.msra.mxu0 %v2413
        %2447 = vmatprep.subr.mxu0 0.0
        %2448 = vmatpush1.msra.mxu0 %v2414
        %2449 = vmatprep.subr.mxu0 0.0
        %2450 = vmatpush1.msra.mxu0 %v2415
        %2451 = vmatprep.subr.mxu0 0.0
        %2452 = vmatpush1.msra.mxu0 0.0
        %2453 = vmatprep.subr.mxu0 0.0
        %2454 = vmatpush1.msra.mxu0 0.0
        %2455 = vmatprep.subr.mxu0 0.0
        %2456 = vmatpush1.msra.mxu0 0.0
        %2457 = vmatprep.subr.mxu0 0.0
        %2458 = vmatpush1.msra.mxu0 0.0
        %2459 = vmatprep.subr.mxu0 0.0
        %2460 = vmatpush1.msra.mxu0 0.0
        %2461 = vmatprep.subr.mxu0 0.0
        %2462 = vmatpush1.msra.mxu0 0.0
        %2463 = vmatprep.subr.mxu0 0.0
        %2464 = vmatpush1.msra.mxu0 0.0
        %2465 = vmatprep.subr.mxu0 0.0
        %2466 = vmatpush1.msra.mxu0 0.0
        %2467 = vmatprep.subr.mxu0 0.0
        %2468 = vmatpush1.msra.mxu0 0.0
        %2469 = vmatprep.subr.mxu0 0.0
        %2470 = vmatpush1.msra.mxu0 0.0
        %2471 = vmatprep.subr.mxu0 0.0
        %2472 = vmatpush1.msra.mxu0 0.0
        %2473 = vmatprep.subr.mxu0 0.0
        %2474 = vmatpush1.msra.mxu0 0.0
        %2475 = vmatprep.subr.mxu0 0.0
        %2476 = vmatpush1.msra.mxu0 0.0
        %2477 = vmatprep.subr.mxu0 0.0
        %2478 = vmatpush1.msra.mxu0 0.0
        %2479 = vmatprep.subr.mxu0 0.0
        %2480 = vmatpush1.msra.mxu0 0.0
        %2481 = vmatprep.subr.mxu0 0.0
        %2482 = vmatpush1.msra.mxu0 0.0
        %2483 = vmatprep.mubr.f32.mxu0 0.0
        %2484 = vmatmul.mubr.f32.gmra.mrb[0].mxu0 %v2417
        %v2485 = vpop.f32.mrb[0].mxu0
        %v2486 = vadd.f32 0.0, %v2485
        %v2487 = vpop.f32.mrb[0].mxu0
        %2488 = vdwg.mxu0
        %v2489 = vadd.f32 %v2398, %v2486
        %s2490 = scalar_lea.vmem %s3, 1536
        %v2491 = vld [vmem:[%s2490] sm:$0xff]
        %v2492 = vld [vmem:[%s2490 + $0x8] sm:$0xff]
        %v2493 = vld [vmem:[%s2490 + $0x10] sm:$0xff]
        %v2494 = vld [vmem:[%s2490 + $0x18] sm:$0xff]
        %v2495 = vld [vmem:[%s2490 + $0x20] sm:$0xff]
        %v2496 = vld [vmem:[%s2490 + $0x28] sm:$0xff]
        %v2497 = vld [vmem:[%s2490 + $0x30] sm:$0xff]
        %v2498 = vld [vmem:[%s2490 + $0x38] sm:$0xff]
        %v2499 = vld [vmem:[%s2490 + $0x40] sm:$0xff]
        %v2500 = vld [vmem:[%s2490 + $0x48] sm:$0xff]
        %v2501 = vld [vmem:[%s2490 + $0x50] sm:$0xff]
        %v2502 = vld [vmem:[%s2490 + $0x58] sm:$0xff]
        %v2503 = vld [vmem:[%s2490 + $0x60] sm:$0xff]
        %v2504 = vld [vmem:[%s2490 + $0x68] sm:$0xff]
        %v2505 = vld [vmem:[%s2490 + $0x70] sm:$0xff]
        %v2506 = vld [vmem:[%s2490 + $0x78] sm:$0xff]
        %2507 = vmatprep.subr.mxu0 0.0
        %2508 = vmatpush1.msra.mxu0 %v2491
        %2509 = vmatprep.subr.mxu0 0.0
        %2510 = vmatpush1.msra.mxu0 %v2492
        %2511 = vmatprep.subr.mxu0 0.0
        %2512 = vmatpush1.msra.mxu0 %v2493
        %2513 = vmatprep.subr.mxu0 0.0
        %2514 = vmatpush1.msra.mxu0 %v2494
        %2515 = vmatprep.subr.mxu0 0.0
        %2516 = vmatpush1.msra.mxu0 %v2495
        %2517 = vmatprep.subr.mxu0 0.0
        %2518 = vmatpush1.msra.mxu0 %v2496
        %2519 = vmatprep.subr.mxu0 0.0
        %2520 = vmatpush1.msra.mxu0 %v2497
        %2521 = vmatprep.subr.mxu0 0.0
        %2522 = vmatpush1.msra.mxu0 %v2498
        %2523 = vmatprep.subr.mxu0 0.0
        %2524 = vmatpush1.msra.mxu0 %v2499
        %2525 = vmatprep.subr.mxu0 0.0
        %2526 = vmatpush1.msra.mxu0 %v2500
        %2527 = vmatprep.subr.mxu0 0.0
        %2528 = vmatpush1.msra.mxu0 %v2501
        %2529 = vmatprep.subr.mxu0 0.0
        %2530 = vmatpush1.msra.mxu0 %v2502
        %2531 = vmatprep.subr.mxu0 0.0
        %2532 = vmatpush1.msra.mxu0 %v2503
        %2533 = vmatprep.subr.mxu0 0.0
        %2534 = vmatpush1.msra.mxu0 %v2504
        %2535 = vmatprep.subr.mxu0 0.0
        %2536 = vmatpush1.msra.mxu0 %v2505
        %2537 = vmatprep.subr.mxu0 0.0
        %2538 = vmatpush1.msra.mxu0 %v2506
        %2539 = vmatprep.subr.mxu0 0.0
        %2540 = vmatpush1.msra.mxu0 0.0
        %2541 = vmatprep.subr.mxu0 0.0
        %2542 = vmatpush1.msra.mxu0 0.0
        %2543 = vmatprep.subr.mxu0 0.0
        %2544 = vmatpush1.msra.mxu0 0.0
        %2545 = vmatprep.subr.mxu0 0.0
        %2546 = vmatpush1.msra.mxu0 0.0
        %2547 = vmatprep.subr.mxu0 0.0
        %2548 = vmatpush1.msra.mxu0 0.0
        %2549 = vmatprep.subr.mxu0 0.0
        %2550 = vmatpush1.msra.mxu0 0.0
        %2551 = vmatprep.subr.mxu0 0.0
        %2552 = vmatpush1.msra.mxu0 0.0
        %2553 = vmatprep.subr.mxu0 0.0
        %2554 = vmatpush1.msra.mxu0 0.0
        %2555 = vmatprep.subr.mxu0 0.0
        %2556 = vmatpush1.msra.mxu0 0.0
        %2557 = vmatprep.subr.mxu0 0.0
        %2558 = vmatpush1.msra.mxu0 0.0
        %2559 = vmatprep.subr.mxu0 0.0
        %2560 = vmatpush1.msra.mxu0 0.0
        %2561 = vmatprep.subr.mxu0 0.0
        %2562 = vmatpush1.msra.mxu0 0.0
        %2563 = vmatprep.subr.mxu0 0.0
        %2564 = vmatpush1.msra.mxu0 0.0
        %2565 = vmatprep.subr.mxu0 0.0
        %2566 = vmatpush1.msra.mxu0 0.0
        %2567 = vmatprep.subr.mxu0 0.0
        %2568 = vmatpush1.msra.mxu0 0.0
        %2569 = vmatprep.subr.mxu0 0.0
        %2570 = vmatpush1.msra.mxu0 0.0
        %2571 = vmatprep.mubr.f32.mxu0 0.0
        %2572 = vmatmul.mubr.f32.gmra.mrb[0].mxu0 %v1415
        %v2573 = vpop.f32.mrb[0].mxu0
        %v2574 = vadd.f32 0.0, %v2573
        %v2575 = vpop.f32.mrb[0].mxu0
        %2576 = vdwg.mxu0
        %v2577 = vadd.f32 %v2489, %v2574
        %s2578 = scalar_lea.vmem %s3, 1664
        %v2579 = vld [vmem:[%s2578] sm:$0xff]
        %v2580 = vld [vmem:[%s2578 + $0x8] sm:$0xff]
        %v2581 = vld [vmem:[%s2578 + $0x10] sm:$0xff]
        %v2582 = vld [vmem:[%s2578 + $0x18] sm:$0xff]
        %v2583 = vld [vmem:[%s2578 + $0x20] sm:$0xff]
        %v2584 = vld [vmem:[%s2578 + $0x28] sm:$0xff]
        %v2585 = vld [vmem:[%s2578 + $0x30] sm:$0xff]
        %v2586 = vld [vmem:[%s2578 + $0x38] sm:$0xff]
        %v2587 = vld [vmem:[%s2578 + $0x40] sm:$0xff]
        %v2588 = vld [vmem:[%s2578 + $0x48] sm:$0xff]
        %v2589 = vld [vmem:[%s2578 + $0x50] sm:$0xff]
        %v2590 = vld [vmem:[%s2578 + $0x58] sm:$0xff]
        %v2591 = vld [vmem:[%s2578 + $0x60] sm:$0xff]
        %v2592 = vld [vmem:[%s2578 + $0x68] sm:$0xff]
        %v2593 = vld [vmem:[%s2578 + $0x70] sm:$0xff]
        %v2594 = vld [vmem:[%s2578 + $0x78] sm:$0xff]
        %v2596 = vrot.slane %v1415, 4
        %2598 = vmatprep.subr.mxu0 0.0
        %2599 = vmatpush1.msra.mxu0 %v2579
        %2600 = vmatprep.subr.mxu0 0.0
        %2601 = vmatpush1.msra.mxu0 %v2580
        %2602 = vmatprep.subr.mxu0 0.0
        %2603 = vmatpush1.msra.mxu0 %v2581
        %2604 = vmatprep.subr.mxu0 0.0
        %2605 = vmatpush1.msra.mxu0 %v2582
        %2606 = vmatprep.subr.mxu0 0.0
        %2607 = vmatpush1.msra.mxu0 %v2583
        %2608 = vmatprep.subr.mxu0 0.0
        %2609 = vmatpush1.msra.mxu0 %v2584
        %2610 = vmatprep.subr.mxu0 0.0
        %2611 = vmatpush1.msra.mxu0 %v2585
        %2612 = vmatprep.subr.mxu0 0.0
        %2613 = vmatpush1.msra.mxu0 %v2586
        %2614 = vmatprep.subr.mxu0 0.0
        %2615 = vmatpush1.msra.mxu0 %v2587
        %2616 = vmatprep.subr.mxu0 0.0
        %2617 = vmatpush1.msra.mxu0 %v2588
        %2618 = vmatprep.subr.mxu0 0.0
        %2619 = vmatpush1.msra.mxu0 %v2589
        %2620 = vmatprep.subr.mxu0 0.0
        %2621 = vmatpush1.msra.mxu0 %v2590
        %2622 = vmatprep.subr.mxu0 0.0
        %2623 = vmatpush1.msra.mxu0 %v2591
        %2624 = vmatprep.subr.mxu0 0.0
        %2625 = vmatpush1.msra.mxu0 %v2592
        %2626 = vmatprep.subr.mxu0 0.0
        %2627 = vmatpush1.msra.mxu0 %v2593
        %2628 = vmatprep.subr.mxu0 0.0
        %2629 = vmatpush1.msra.mxu0 %v2594
        %2630 = vmatprep.subr.mxu0 0.0
        %2631 = vmatpush1.msra.mxu0 0.0
        %2632 = vmatprep.subr.mxu0 0.0
        %2633 = vmatpush1.msra.mxu0 0.0
        %2634 = vmatprep.subr.mxu0 0.0
        %2635 = vmatpush1.msra.mxu0 0.0
        %2636 = vmatprep.subr.mxu0 0.0
        %2637 = vmatpush1.msra.mxu0 0.0
        %2638 = vmatprep.subr.mxu0 0.0
        %2639 = vmatpush1.msra.mxu0 0.0
        %2640 = vmatprep.subr.mxu0 0.0
        %2641 = vmatpush1.msra.mxu0 0.0
        %2642 = vmatprep.subr.mxu0 0.0
        %2643 = vmatpush1.msra.mxu0 0.0
        %2644 = vmatprep.subr.mxu0 0.0
        %2645 = vmatpush1.msra.mxu0 0.0
        %2646 = vmatprep.subr.mxu0 0.0
        %2647 = vmatpush1.msra.mxu0 0.0
        %2648 = vmatprep.subr.mxu0 0.0
        %2649 = vmatpush1.msra.mxu0 0.0
        %2650 = vmatprep.subr.mxu0 0.0
        %2651 = vmatpush1.msra.mxu0 0.0
        %2652 = vmatprep.subr.mxu0 0.0
        %2653 = vmatpush1.msra.mxu0 0.0
        %2654 = vmatprep.subr.mxu0 0.0
        %2655 = vmatpush1.msra.mxu0 0.0
        %2656 = vmatprep.subr.mxu0 0.0
        %2657 = vmatpush1.msra.mxu0 0.0
        %2658 = vmatprep.subr.mxu0 0.0
        %2659 = vmatpush1.msra.mxu0 0.0
        %2660 = vmatprep.subr.mxu0 0.0
        %2661 = vmatpush1.msra.mxu0 0.0
        %2662 = vmatprep.mubr.f32.mxu0 0.0
        %2663 = vmatmul.mubr.f32.gmra.mrb[0].mxu0 %v2596
        %v2664 = vpop.f32.mrb[0].mxu0
        %v2665 = vadd.f32 0.0, %v2664
        %v2666 = vpop.f32.mrb[0].mxu0
        %2667 = vdwg.mxu0
        %v2668 = vadd.f32 %v2577, %v2665
        %2669 = vst [vmem:[%s216] sm:$0x1] %v2668
        %s2670 = sand.u32 %s137, 1
        %s2671 = scalar_lea.sflag [#allocation3], %s2670
        %s2672 = sand.u32 %s137, 1
        %s2673 = scalar_lea.vmem [#allocation2], %s2672
        // Predicated region
        $region41: #{cnn_forward.1} parent=39 // pred_check
          %p2674 = pneg %p147
        $region42: #{cnn_forward.1} parent=39 // pred_check_branch
          %2676 = sbr.rel (%p2674) target = $region44
        $region43: #{cnn_forward.1} parent=39 // pred_region
          %s2678 = ssub.s32 16, 16
          %2679 = vsyncadd %s2671, %s2678
          %s2680 = smul.addr %s19, 16
          %s2681 = scalar_lea.hbm %s5, %s2680
          %s2683 = sshll.u32 %s2673, 4
          %s2684 = int_to_ptr.vmem [resolvable:$true] %s2683
          %2686 = dma.vmem_to_hbm [thread:$0]  %s2684, 16, %s2681, %s2671
        $region44: #{cnn_forward.1} parent=39 // pred_fallthru
          _
      $region40: #{cnn_forward.1} parent=5 // pred_fallthru
        _
      %p2687 = scmp.le.s32.totalorder 2, %s14
      // Predicated region
      $region45: #{cnn_forward.1} parent=5 // pred_check
        %p2688 = pneg %p2687
      $region46: #{cnn_forward.1} parent=5 // pred_check_branch
        %2690 = sbr.rel (%p2688) target = $region48
      $region47: #{cnn_forward.1} parent=5 // pred_region
        %s2691 = ssub.s32 %s14, 2
        // Predicated region
        $region49: #{cnn_forward.1} parent=47 // pred_check
          %p2692 = pneg %p153
        $region50: #{cnn_forward.1} parent=47 // pred_check_branch
          %2694 = sbr.rel (%p2692) target = $region52
        $region51: #{cnn_forward.1} parent=47 // pred_region
          %s2695 = sand.u32 %s138, 1
          %s2696 = scalar_lea.sflag [#allocation3], %s2695
          %s2697 = sand.u32 %s138, 1
          %s2698 = scalar_lea.vmem [#allocation2], %s2697
          %2699 = dma.done %s2696, 16
        $region52: #{cnn_forward.1} parent=47 // pred_fallthru
          _
      $region48: #{cnn_forward.1} parent=5 // pred_fallthru
        _
    $region6: #{cnn_forward.1} parent=1 // loop_footer
      %s18 = sadd.s32 1, %s14
    $region7: #{cnn_forward.1} parent=1 // loop_footer_branch
      %13 = sbr.rel target = $region3
    $region8: #{cnn_forward.1} parent=1 // loop_exit
      _
    %2700 = vsyncpa [#allocation3], 1
    %s2701 = scalar_lea.sflag [#allocation3], 1
    %2702 = vsyncpa %s2701, 1

</llo_original>
